<compile_context>
chip_gen: v7x
topology: tpu7x:2x2x1
jax: 0.10.0
libtpu: 0.0.40
codegen_flags: <defaults>
</compile_context>

<pallas_src>
import functools

import jax
import jax.numpy as jnp
from jax.experimental import pallas as pl
from jax.experimental.pallas import tpu as pltpu


# ----------------------------- in-kernel helpers ----------------------------

def _ln(x, g, b, eps):
    mean = jnp.mean(x, axis=-1, keepdims=True)
    var = jnp.mean(jnp.square(x - mean), axis=-1, keepdims=True)
    return (x - mean) * jax.lax.rsqrt(var + eps) * g + b


def _gelu_tanh(x):
    c = jnp.float32(0.7978845608028654)  # sqrt(2/pi)
    return 0.5 * x * (1.0 + jnp.tanh(c * (x + 0.044715 * x * x * x)))


# ------------------------------- fused kernel -------------------------------

def _encoder_kernel(x_hbm_ref, mask_ref, embg_ref, embb_ref,
                    wqkv_ref, bqkv_ref, wo_ref, bo_ref,
                    ln1g_ref, ln1b_ref, w1_ref, b1_ref, w2_ref, b2_ref,
                    ln2g_ref, ln2b_ref,
                    o_ref, x_sc, ctx_sc, dma_sem,
                    *, bt, seq, n_heads, head_dim, eps):
    """grid = (batch_tiles, n_layers); one step == one layer of one batch tile.

    x_sc  : (bt*seq, H) f32  activation carried across the layer axis.
    ctx_sc: (bt*seq, H) bf16 merged per-head attention context (rebuilt每layer).
    """
    hidden = n_heads * head_dim
    rows = bt * seq
    b = pl.program_id(0)
    layer = pl.program_id(1)

    # ---- layer 0: pull this batch tile's embeddings from HBM, fold emb LN ----
    @pl.when(layer == 0)
    def _():
        row0 = pl.multiple_of(b * rows, rows)
        cp = pltpu.make_async_copy(x_hbm_ref.at[pl.ds(row0, rows), :], x_sc, dma_sem)
        cp.start()
        cp.wait()
        x_sc[...] = _ln(x_sc[...], embg_ref[...], embb_ref[...], eps)

    x = x_sc[...]                                          # (rows, H) f32
    x_bf = x.astype(jnp.bfloat16)

    # ---- fused QKV projection: one bf16 MXU pass, lane width 3H ----
    qkv = jnp.dot(x_bf, wqkv_ref[...],
                  preferred_element_type=jnp.float32) + bqkv_ref[...]     # (rows, 3H) f32

    scale = jnp.float32(1.0 / float(head_dim) ** 0.5)
    mask_b = mask_ref[...]                                 # (bt, 1, seq) additive bias

    # ---- multi-head attention (static unroll over heads) ----
    # Per-head contexts land in ctx_sc at static lane offsets so the output
    # projection below is a single full-K (rows,H)@(H,H) dot.
    for h in range(n_heads):
        lo = h * head_dim
        qh = (qkv[:, lo:lo + head_dim] * scale).reshape(bt, seq, head_dim)
        kh = qkv[:, hidden + lo:hidden + lo + head_dim].reshape(bt, seq, head_dim)
        vh = qkv[:, 2 * hidden + lo:2 * hidden + lo + head_dim].reshape(bt, seq, head_dim)

        s = jnp.einsum('bqd,bkd->bqk',
                       qh.astype(jnp.bfloat16), kh.astype(jnp.bfloat16),
                       preferred_element_type=jnp.float32)                # (bt, S, S) f32
        s = s + mask_b
        mx = jnp.max(s, axis=-1, keepdims=True)
        p = jnp.exp(s - mx)
        denom = jnp.sum(p, axis=-1, keepdims=True)
        p = (p * pl.reciprocal(denom, approx=True)).astype(jnp.bfloat16)  # EUP recip
        ch = jnp.einsum('bqk,bkd->bqd', p, vh.astype(jnp.bfloat16),
                        preferred_element_type=jnp.float32)               # (bt, S, Dh)
        ctx_sc[:, lo:lo + head_dim] = ch.reshape(rows, head_dim).astype(jnp.bfloat16)

    # ---- output projection: ONE full-K dot (head merge already done) ----
    attn = jnp.dot(ctx_sc[...], wo_ref[...],
                   preferred_element_type=jnp.float32) + bo_ref[...]

    # ---- residual + LN, FFN (GELU), residual + LN ----
    h1 = _ln(x + attn, ln1g_ref[...], ln1b_ref[...], eps)
    f = jnp.dot(h1.astype(jnp.bfloat16), w1_ref[...],
                preferred_element_type=jnp.float32) + b1_ref[...]
    f = _gelu_tanh(f)
    f2 = jnp.dot(f.astype(jnp.bfloat16), w2_ref[...],
                 preferred_element_type=jnp.float32) + b2_ref[...]
    x_new = _ln(h1 + f2, ln2g_ref[...], ln2b_ref[...], eps)

    x_sc[...] = x_new                                      # carry to next layer

    @pl.when(layer == pl.num_programs(1) - 1)
    def _():
        o_ref[...] = x_new.astype(o_ref.dtype)


# ------------------------------ Model (glue) --------------------------------

def init_params(key, *, vocab, max_pos, hidden, n_layers, n_heads, ffn):
    std = 0.02
    H, F, L = hidden, ffn, n_layers
    keys = jax.random.split(key, 8)

    def nrm(k, shape, dtype=jnp.float32):
        return (jax.random.normal(k, shape, jnp.float32) * std).astype(dtype)

    return {
        "word_emb": nrm(keys[0], (vocab, H)),
        "pos_emb": nrm(keys[1], (max_pos, H)),
        "emb_ln_g": jnp.ones((1, H), jnp.float32),
        "emb_ln_b": jnp.zeros((1, H), jnp.float32),
        # per-layer weights stacked on a leading layer axis; Q|K|V fused.
        # Matmul weights are bf16 (MXU inputs, half the per-layer DMA bytes);
        # biases / LN params stay f32.
        "wqkv": nrm(keys[2], (L, H, 3 * H), jnp.bfloat16),
        "bqkv": jnp.zeros((L, 1, 3 * H), jnp.float32),
        "wo": nrm(keys[3], (L, H, H), jnp.bfloat16),
        "bo": jnp.zeros((L, 1, H), jnp.float32),
        "ln1_g": jnp.ones((L, 1, H), jnp.float32),
        "ln1_b": jnp.zeros((L, 1, H), jnp.float32),
        "w1": nrm(keys[4], (L, H, F), jnp.bfloat16),
        "b1": jnp.zeros((L, 1, F), jnp.float32),
        "w2": nrm(keys[5], (L, F, H), jnp.bfloat16),
        "b2": jnp.zeros((L, 1, H), jnp.float32),
        "ln2_g": jnp.ones((L, 1, H), jnp.float32),
        "ln2_b": jnp.zeros((L, 1, H), jnp.float32),
        "cls_w": nrm(keys[6], (H, 1)),
        "cls_b": jnp.zeros((1,), jnp.float32),
    }


def deberta_classifier_forward(params, input_ids, attention_mask, *,
                               n_heads, batch_tile=1):
    B, S = input_ids.shape
    H = params["word_emb"].shape[1]
    Dh = H // n_heads
    L = params["wqkv"].shape[0]
    F = params["w1"].shape[-1]
    assert B % batch_tile == 0
    rows = batch_tile * S

    # embeddings (table gather stays in JAX glue; embedding LN is in-kernel)
    x = jnp.take(params["word_emb"], input_ids, axis=0) + params["pos_emb"][:S][None]
    x = x.reshape(B * S, H).astype(jnp.float32)

    # additive key-mask bias, one copy per batch row only
    mask_bias = ((1.0 - attention_mask.astype(jnp.float32))
                 * jnp.float32(-1e9)).reshape(B, 1, S)

    kernel = functools.partial(_encoder_kernel, bt=batch_tile, seq=S,
                               n_heads=n_heads, head_dim=Dh, eps=1e-7)

    def small2(d0, d1):
        return pl.BlockSpec((d0, d1), lambda b, l: (0, 0))

    def per_layer(d1, d2):
        return pl.BlockSpec((None, d1, d2), lambda b, l: (l, 0, 0))

    # TODO(synk): at deberta-base shapes (H=768, F=3072, S=512) also tile the
    # bt*S row dimension (extra grid axis or inner fori_loop) so the qkv / FFN
    # temporaries are (tile_m, 3H)/(tile_m, F), and tile attention over KV
    # blocks; the whole-tile temporaries below only fit at small shapes.
    hidden = pl.pallas_call(
        kernel,
        out_shape=jax.ShapeDtypeStruct((B * S, H), jnp.float32),
        grid=(B // batch_tile, L),
        in_specs=[
            pl.BlockSpec(memory_space=pl.ANY),                      # embeddings (HBM, DMA'd at layer 0)
            pl.BlockSpec((batch_tile, 1, S), lambda b, l: (b, 0, 0)),  # mask bias
            small2(1, H),               # emb_ln_g
            small2(1, H),               # emb_ln_b
            per_layer(H, 3 * H),        # wqkv (bf16)
            per_layer(1, 3 * H),        # bqkv
            per_layer(H, H),            # wo   (bf16)
            per_layer(1, H),            # bo
            per_layer(1, H),            # ln1_g
            per_layer(1, H),            # ln1_b
            per_layer(H, F),            # w1   (bf16)
            per_layer(1, F),            # b1
            per_layer(F, H),            # w2   (bf16)
            per_layer(1, H),            # b2
            per_layer(1, H),            # ln2_g
            per_layer(1, H),            # ln2_b
        ],
        out_specs=pl.BlockSpec((rows, H), lambda b, l: (b, 0)),
        scratch_shapes=[
            pltpu.VMEM((rows, H), jnp.float32),     # activation carry
            pltpu.VMEM((rows, H), jnp.bfloat16),    # merged attention context
            pltpu.SemaphoreType.DMA(()),            # embedding DMA
        ],
        compiler_params=pltpu.CompilerParams(
            dimension_semantics=("parallel", "arbitrary"),  # batch tiles || , layers sequential
            vmem_limit_bytes=48 * 1024 * 1024),
    )(x, mask_bias, params["emb_ln_g"], params["emb_ln_b"],
      params["wqkv"], params["bqkv"], params["wo"], params["bo"],
      params["ln1_g"], params["ln1_b"], params["w1"], params["b1"],
      params["w2"], params["b2"], params["ln2_g"], params["ln2_b"])

    # pooled = last_hidden_state[:, 0, :]; dropout (eval) = identity.
    # classifier is a tiny (B,H)@(H,1) dot -> keep in plain jnp (launch overhead only).
    pooled = hidden.reshape(B, S, H)[:, 0, :]
    logits = jnp.dot(pooled, params["cls_w"]) + params["cls_b"]
    return logits


# --------------------------------- driver -----------------------------------

if __name__ == "__main__":
    B, S = 2, 16
    HIDDEN, N_LAYERS, N_HEADS, FFN = 64, 2, 4, 128
    VOCAB = 100

    key = jax.random.PRNGKey(0)
    kp, ki = jax.random.split(key)
    params = init_params(kp, vocab=VOCAB, max_pos=S, hidden=HIDDEN,
                         n_layers=N_LAYERS, n_heads=N_HEADS, ffn=FFN)

    input_ids = jax.random.randint(ki, (B, S), 0, VOCAB, dtype=jnp.int32)
    attention_mask = jnp.concatenate(
        [jnp.ones((B, S - 4), jnp.int32), jnp.zeros((B, 4), jnp.int32)], axis=1)

    fwd = jax.jit(functools.partial(deberta_classifier_forward,
                                    n_heads=N_HEADS, batch_tile=1))
    logits = fwd(params, input_ids, attention_mask)
    jax.block_until_ready(logits)

    assert logits.shape == (B, 1), logits.shape
    print("KERNEL_OK")
</pallas_src>

<mosaic_0001>
module attributes {stable_mosaic.version = 11 : i64} {
  func.func @_encoder_kernel(%arg0: i32, %arg1: i32, %arg2: memref<32x64xf32, #tpu.memory_space<any>>, %arg3: memref<1x1x16xf32, #tpu.memory_space<vmem>>, %arg4: memref<1x64xf32, #tpu.memory_space<vmem>>, %arg5: memref<1x64xf32, #tpu.memory_space<vmem>>, %arg6: memref<1x64x192xbf16, #tpu.memory_space<vmem>>, %arg7: memref<1x1x192xf32, #tpu.memory_space<vmem>>, %arg8: memref<1x64x64xbf16, #tpu.memory_space<vmem>>, %arg9: memref<1x1x64xf32, #tpu.memory_space<vmem>>, %arg10: memref<1x1x64xf32, #tpu.memory_space<vmem>>, %arg11: memref<1x1x64xf32, #tpu.memory_space<vmem>>, %arg12: memref<1x64x128xbf16, #tpu.memory_space<vmem>>, %arg13: memref<1x1x128xf32, #tpu.memory_space<vmem>>, %arg14: memref<1x128x64xbf16, #tpu.memory_space<vmem>>, %arg15: memref<1x1x64xf32, #tpu.memory_space<vmem>>, %arg16: memref<1x1x64xf32, #tpu.memory_space<vmem>>, %arg17: memref<1x1x64xf32, #tpu.memory_space<vmem>>, %arg18: memref<16x64xf32, #tpu.memory_space<vmem>>, %arg19: memref<16x64xf32, #tpu.memory_space<vmem>>, %arg20: memref<16x64xbf16, #tpu.memory_space<vmem>>, %arg21: memref<!tpu.dma_semaphore, #tpu.memory_space<semaphore_mem>>) attributes {dimension_semantics = [#tpu.dimension_semantics<parallel>, #tpu.dimension_semantics<arbitrary>], iteration_bounds = array<i64: 2, 2>, scalar_prefetch = 0 : i64, scratch_operands = 3 : i64, tpu.core_type = #tpu.core_type<tc>, window_params = [{}, {transform_indices = @transform_1, window_bounds = array<i64: 1, 1, 16>}, {pipeline_mode = #tpu.pipeline_mode<synchronous>, transform_indices = @transform_2, window_bounds = array<i64: 1, 64>}, {pipeline_mode = #tpu.pipeline_mode<synchronous>, transform_indices = @transform_3, window_bounds = array<i64: 1, 64>}, {transform_indices = @transform_4, window_bounds = array<i64: 1, 64, 192>}, {transform_indices = @transform_5, window_bounds = array<i64: 1, 1, 192>}, {transform_indices = @transform_6, window_bounds = array<i64: 1, 64, 64>}, {transform_indices = @transform_7, window_bounds = array<i64: 1, 1, 64>}, {transform_indices = @transform_8, window_bounds = array<i64: 1, 1, 64>}, {transform_indices = @transform_9, window_bounds = array<i64: 1, 1, 64>}, {transform_indices = @transform_10, window_bounds = array<i64: 1, 64, 128>}, {transform_indices = @transform_11, window_bounds = array<i64: 1, 1, 128>}, {transform_indices = @transform_12, window_bounds = array<i64: 1, 128, 64>}, {transform_indices = @transform_13, window_bounds = array<i64: 1, 1, 64>}, {transform_indices = @transform_14, window_bounds = array<i64: 1, 1, 64>}, {transform_indices = @transform_15, window_bounds = array<i64: 1, 1, 64>}, {transform_indices = @transform_16, window_bounds = array<i64: 16, 64>}]} {
    %c0_i32 = arith.constant 0 : i32
    %0 = arith.cmpi eq, %arg1, %c0_i32 : i32
    %1 = arith.extui %0 : i1 to i32
    %c0_i32_0 = arith.constant 0 : i32
    %2 = arith.cmpi ne, %1, %c0_i32_0 : i32
    scf.if %2 {
      %c16_i32 = arith.constant 16 : i32
      %224 = arith.muli %arg0, %c16_i32 : i32
      %225 = tpu.assume_multiple %224, 16 : i32
      %c0_i32_88 = arith.constant 0 : i32
      %226 = tpu.memref_slice %arg2[%225, %c0_i32_88] : memref<32x64xf32, #tpu.memory_space<any>> -> memref<16x64xf32, #tpu.memory_space<any>>
      tpu.enqueue_dma source(%226 : memref<16x64xf32, #tpu.memory_space<any>>) target(%arg19 : memref<16x64xf32, #tpu.memory_space<vmem>>) target_semaphore(%arg21 : memref<!tpu.dma_semaphore, #tpu.memory_space<semaphore_mem>>)
      %c0_i32_89 = arith.constant 0 : i32
      %227 = tpu.memref_slice %arg2[%225, %c0_i32_89] : memref<32x64xf32, #tpu.memory_space<any>> -> memref<16x64xf32, #tpu.memory_space<any>>
      tpu.wait_dma2 semaphore(%arg21 : memref<!tpu.dma_semaphore, #tpu.memory_space<semaphore_mem>>) src(%227 : memref<16x64xf32, #tpu.memory_space<any>>) dst(%arg19 : memref<16x64xf32, #tpu.memory_space<vmem>>)
      %c0_90 = arith.constant 0 : index
      %c0_91 = arith.constant 0 : index
      %228 = vector.load %arg19[%c0_90, %c0_91] : memref<16x64xf32, #tpu.memory_space<vmem>>, vector<16x64xf32>
      %c0_92 = arith.constant 0 : index
      %c0_93 = arith.constant 0 : index
      %229 = vector.load %arg4[%c0_92, %c0_93] : memref<1x64xf32, #tpu.memory_space<vmem>>, vector<1x64xf32>
      %c0_94 = arith.constant 0 : index
      %c0_95 = arith.constant 0 : index
      %230 = vector.load %arg5[%c0_94, %c0_95] : memref<1x64xf32, #tpu.memory_space<vmem>>, vector<1x64xf32>
      %cst_96 = arith.constant dense<0.000000e+00> : vector<16xf32>
      %231 = vector.multi_reduction <add>, %228, %cst_96 [1] : vector<16x64xf32> to vector<16xf32>
      %232 = vector.shape_cast %231 : vector<16xf32> to vector<16x1xf32>
      %cst_97 = arith.constant 6.400000e+01 : f32
      %233 = vector.broadcast %cst_97 : f32 to vector<16x1xf32>
      %234 = arith.divf %232, %233 : vector<16x1xf32>
      %235 = vector.broadcast %234 : vector<16x1xf32> to vector<16x64xf32>
      %236 = arith.subf %228, %235 : vector<16x64xf32>
      %237 = arith.mulf %236, %236 : vector<16x64xf32>
      %cst_98 = arith.constant dense<0.000000e+00> : vector<16xf32>
      %238 = vector.multi_reduction <add>, %237, %cst_98 [1] : vector<16x64xf32> to vector<16xf32>
      %239 = vector.shape_cast %238 : vector<16xf32> to vector<16x1xf32>
      %cst_99 = arith.constant 6.400000e+01 : f32
      %240 = vector.broadcast %cst_99 : f32 to vector<16x1xf32>
      %241 = arith.divf %239, %240 : vector<16x1xf32>
      %242 = vector.broadcast %234 : vector<16x1xf32> to vector<16x64xf32>
      %243 = arith.subf %228, %242 : vector<16x64xf32>
      %cst_100 = arith.constant 1.000000e-07 : f32
      %244 = vector.broadcast %cst_100 : f32 to vector<16x1xf32>
      %245 = arith.addf %241, %244 : vector<16x1xf32>
      %246 = math.rsqrt %245 : vector<16x1xf32>
      %247 = vector.broadcast %246 : vector<16x1xf32> to vector<16x64xf32>
      %248 = arith.mulf %243, %247 : vector<16x64xf32>
      %249 = vector.broadcast %229 : vector<1x64xf32> to vector<16x64xf32>
      %250 = arith.mulf %248, %249 : vector<16x64xf32>
      %251 = vector.broadcast %230 : vector<1x64xf32> to vector<16x64xf32>
      %252 = arith.addf %250, %251 : vector<16x64xf32>
      %c0_101 = arith.constant 0 : index
      %c0_102 = arith.constant 0 : index
      %253 = vector.load %arg19[%c0_101, %c0_102] : memref<16x64xf32, #tpu.memory_space<vmem>>, vector<16x64xf32>
      tpu.vector_store %arg19[%c0_101, %c0_102], %252 {strides = array<i32>} : memref<16x64xf32, #tpu.memory_space<vmem>>, vector<16x64xf32>,
    } else {
    }
    %c0 = arith.constant 0 : index
    %c0_1 = arith.constant 0 : index
    %3 = vector.load %arg19[%c0, %c0_1] : memref<16x64xf32, #tpu.memory_space<vmem>>, vector<16x64xf32>
    %4 = arith.truncf %3 : vector<16x64xf32> to vector<16x64xbf16>
    %c0_2 = arith.constant 0 : index
    %c0_3 = arith.constant 0 : index
    %c0_4 = arith.constant 0 : index
    %5 = vector.load %arg6[%c0_2, %c0_3, %c0_4] : memref<1x64x192xbf16, #tpu.memory_space<vmem>>, vector<1x64x192xbf16>
    %6 = vector.shape_cast %5 : vector<1x64x192xbf16> to vector<64x192xbf16>
    %cst = arith.constant dense<0.000000e+00> : vector<16x192xf32>
    %7 = tpu.matmul %4, %6, %cst {dimension_numbers = #tpu.dot_dimension_numbers<[1], [0], [0], [1], [0, 0, 1, 1], [], []>} : vector<16x64xbf16>, vector<64x192xbf16>, vector<16x192xf32> -> vector<16x192xf32>
    %c0_5 = arith.constant 0 : index
    %c0_6 = arith.constant 0 : index
    %c0_7 = arith.constant 0 : index
    %8 = vector.load %arg7[%c0_5, %c0_6, %c0_7] : memref<1x1x192xf32, #tpu.memory_space<vmem>>, vector<1x1x192xf32>
    %9 = vector.shape_cast %8 : vector<1x1x192xf32> to vector<1x192xf32>
    %10 = vector.broadcast %9 : vector<1x192xf32> to vector<16x192xf32>
    %11 = arith.addf %7, %10 : vector<16x192xf32>
    %c0_8 = arith.constant 0 : index
    %c0_9 = arith.constant 0 : index
    %c0_10 = arith.constant 0 : index
    %12 = vector.load %arg3[%c0_8, %c0_9, %c0_10] : memref<1x1x16xf32, #tpu.memory_space<vmem>>, vector<1x1x16xf32>
    %13 = vector.extract_strided_slice %11 {offsets = [0, 0], sizes = [16, 16], strides = [1, 1]} : vector<16x192xf32> to vector<16x16xf32>
    %cst_11 = arith.constant 2.500000e-01 : f32
    %14 = vector.broadcast %cst_11 : f32 to vector<16x16xf32>
    %15 = arith.mulf %13, %14 : vector<16x16xf32>
    %16 = vector.shape_cast %15 : vector<16x16xf32> to vector<1x16x16xf32>
    %17 = vector.extract_strided_slice %11 {offsets = [0, 64], sizes = [16, 16], strides = [1, 1]} : vector<16x192xf32> to vector<16x16xf32>
    %18 = vector.shape_cast %17 : vector<16x16xf32> to vector<1x16x16xf32>
    %19 = vector.extract_strided_slice %11 {offsets = [0, 128], sizes = [16, 16], strides = [1, 1]} : vector<16x192xf32> to vector<16x16xf32>
    %20 = vector.shape_cast %19 : vector<16x16xf32> to vector<1x16x16xf32>
    %21 = arith.truncf %16 : vector<1x16x16xf32> to vector<1x16x16xbf16>
    %22 = arith.truncf %18 : vector<1x16x16xf32> to vector<1x16x16xbf16>
    "tpu.trace_start"() <{level = 10 : i32, message = "bqd,bkd->bqk"}> : () -> ()
    %cst_12 = arith.constant dense<0.000000e+00> : vector<1x16x16xf32>
    %23 = tpu.matmul %21, %22, %cst_12 {dimension_numbers = #tpu.dot_dimension_numbers<[2], [2], [1], [1], [0, 0, 0, 1, 1, 1], [0], [0]>} : vector<1x16x16xbf16>, vector<1x16x16xbf16>, vector<1x16x16xf32> -> vector<1x16x16xf32>
    "tpu.trace_stop"() : () -> ()
    %24 = vector.broadcast %12 : vector<1x1x16xf32> to vector<1x16x16xf32>
    %25 = arith.addf %23, %24 : vector<1x16x16xf32>
    %cst_13 = arith.constant dense<0xFF800000> : vector<1x16xf32>
    %26 = vector.multi_reduction <maximumf>, %25, %cst_13 [2] : vector<1x16x16xf32> to vector<1x16xf32>
    %27 = vector.shape_cast %26 : vector<1x16xf32> to vector<1x16x1xf32>
    %28 = vector.broadcast %27 : vector<1x16x1xf32> to vector<1x16x16xf32>
    %29 = arith.subf %25, %28 : vector<1x16x16xf32>
    %30 = math.exp %29 : vector<1x16x16xf32>
    %cst_14 = arith.constant dense<0.000000e+00> : vector<1x16xf32>
    %31 = vector.multi_reduction <add>, %30, %cst_14 [2] : vector<1x16x16xf32> to vector<1x16xf32>
    %32 = vector.shape_cast %31 : vector<1x16xf32> to vector<1x16x1xf32>
    %33 = tpu.reciprocal %32 {approx = true} : vector<1x16x1xf32> -> vector<1x16x1xf32>
    %34 = vector.broadcast %33 : vector<1x16x1xf32> to vector<1x16x16xf32>
    %35 = arith.mulf %30, %34 : vector<1x16x16xf32>
    %36 = arith.truncf %35 : vector<1x16x16xf32> to vector<1x16x16xbf16>
    %37 = arith.truncf %20 : vector<1x16x16xf32> to vector<1x16x16xbf16>
    "tpu.trace_start"() <{level = 10 : i32, message = "bqk,bkd->bqd"}> : () -> ()
    %cst_15 = arith.constant dense<0.000000e+00> : vector<1x16x16xf32>
    %38 = tpu.matmul %36, %37, %cst_15 {dimension_numbers = #tpu.dot_dimension_numbers<[2], [1], [1], [2], [0, 0, 0, 1, 1, 2], [0], [0]>} : vector<1x16x16xbf16>, vector<1x16x16xbf16>, vector<1x16x16xf32> -> vector<1x16x16xf32>
    "tpu.trace_stop"() : () -> ()
    %39 = vector.shape_cast %38 : vector<1x16x16xf32> to vector<16x16xf32>
    %40 = arith.truncf %39 : vector<16x16xf32> to vector<16x16xbf16>
    %c0_16 = arith.constant 0 : index
    %c0_17 = arith.constant 0 : index
    %41 = vector.load %arg20[%c0_16, %c0_17] : memref<16x64xbf16, #tpu.memory_space<vmem>>, vector<16x16xbf16>
    tpu.vector_store %arg20[%c0_16, %c0_17], %40 {strides = array<i32>} : memref<16x64xbf16, #tpu.memory_space<vmem>>, vector<16x16xbf16>,
    %42 = vector.extract_strided_slice %11 {offsets = [0, 16], sizes = [16, 16], strides = [1, 1]} : vector<16x192xf32> to vector<16x16xf32>
    %cst_18 = arith.constant 2.500000e-01 : f32
    %43 = vector.broadcast %cst_18 : f32 to vector<16x16xf32>
    %44 = arith.mulf %42, %43 : vector<16x16xf32>
    %45 = vector.shape_cast %44 : vector<16x16xf32> to vector<1x16x16xf32>
    %46 = vector.extract_strided_slice %11 {offsets = [0, 80], sizes = [16, 16], strides = [1, 1]} : vector<16x192xf32> to vector<16x16xf32>
    %47 = vector.shape_cast %46 : vector<16x16xf32> to vector<1x16x16xf32>
    %48 = vector.extract_strided_slice %11 {offsets = [0, 144], sizes = [16, 16], strides = [1, 1]} : vector<16x192xf32> to vector<16x16xf32>
    %49 = vector.shape_cast %48 : vector<16x16xf32> to vector<1x16x16xf32>
    %50 = arith.truncf %45 : vector<1x16x16xf32> to vector<1x16x16xbf16>
    %51 = arith.truncf %47 : vector<1x16x16xf32> to vector<1x16x16xbf16>
    "tpu.trace_start"() <{level = 10 : i32, message = "bqd,bkd->bqk"}> : () -> ()
    %cst_19 = arith.constant dense<0.000000e+00> : vector<1x16x16xf32>
    %52 = tpu.matmul %50, %51, %cst_19 {dimension_numbers = #tpu.dot_dimension_numbers<[2], [2], [1], [1], [0, 0, 0, 1, 1, 1], [0], [0]>} : vector<1x16x16xbf16>, vector<1x16x16xbf16>, vector<1x16x16xf32> -> vector<1x16x16xf32>
    "tpu.trace_stop"() : () -> ()
    %53 = vector.broadcast %12 : vector<1x1x16xf32> to vector<1x16x16xf32>
    %54 = arith.addf %52, %53 : vector<1x16x16xf32>
    %cst_20 = arith.constant dense<0xFF800000> : vector<1x16xf32>
    %55 = vector.multi_reduction <maximumf>, %54, %cst_20 [2] : vector<1x16x16xf32> to vector<1x16xf32>
    %56 = vector.shape_cast %55 : vector<1x16xf32> to vector<1x16x1xf32>
    %57 = vector.broadcast %56 : vector<1x16x1xf32> to vector<1x16x16xf32>
    %58 = arith.subf %54, %57 : vector<1x16x16xf32>
    %59 = math.exp %58 : vector<1x16x16xf32>
    %cst_21 = arith.constant dense<0.000000e+00> : vector<1x16xf32>
    %60 = vector.multi_reduction <add>, %59, %cst_21 [2] : vector<1x16x16xf32> to vector<1x16xf32>
    %61 = vector.shape_cast %60 : vector<1x16xf32> to vector<1x16x1xf32>
    %62 = tpu.reciprocal %61 {approx = true} : vector<1x16x1xf32> -> vector<1x16x1xf32>
    %63 = vector.broadcast %62 : vector<1x16x1xf32> to vector<1x16x16xf32>
    %64 = arith.mulf %59, %63 : vector<1x16x16xf32>
    %65 = arith.truncf %64 : vector<1x16x16xf32> to vector<1x16x16xbf16>
    %66 = arith.truncf %49 : vector<1x16x16xf32> to vector<1x16x16xbf16>
    "tpu.trace_start"() <{level = 10 : i32, message = "bqk,bkd->bqd"}> : () -> ()
    %cst_22 = arith.constant dense<0.000000e+00> : vector<1x16x16xf32>
    %67 = tpu.matmul %65, %66, %cst_22 {dimension_numbers = #tpu.dot_dimension_numbers<[2], [1], [1], [2], [0, 0, 0, 1, 1, 2], [0], [0]>} : vector<1x16x16xbf16>, vector<1x16x16xbf16>, vector<1x16x16xf32> -> vector<1x16x16xf32>
    "tpu.trace_stop"() : () -> ()
    %68 = vector.shape_cast %67 : vector<1x16x16xf32> to vector<16x16xf32>
    %69 = arith.truncf %68 : vector<16x16xf32> to vector<16x16xbf16>
    %c0_23 = arith.constant 0 : index
    %c16 = arith.constant 16 : index
    %70 = vector.load %arg20[%c0_23, %c16] : memref<16x64xbf16, #tpu.memory_space<vmem>>, vector<16x16xbf16>
    tpu.vector_store %arg20[%c0_23, %c16], %69 {strides = array<i32>} : memref<16x64xbf16, #tpu.memory_space<vmem>>, vector<16x16xbf16>,
    %71 = vector.extract_strided_slice %11 {offsets = [0, 32], sizes = [16, 16], strides = [1, 1]} : vector<16x192xf32> to vector<16x16xf32>
    %cst_24 = arith.constant 2.500000e-01 : f32
    %72 = vector.broadcast %cst_24 : f32 to vector<16x16xf32>
    %73 = arith.mulf %71, %72 : vector<16x16xf32>
    %74 = vector.shape_cast %73 : vector<16x16xf32> to vector<1x16x16xf32>
    %75 = vector.extract_strided_slice %11 {offsets = [0, 96], sizes = [16, 16], strides = [1, 1]} : vector<16x192xf32> to vector<16x16xf32>
    %76 = vector.shape_cast %75 : vector<16x16xf32> to vector<1x16x16xf32>
    %77 = vector.extract_strided_slice %11 {offsets = [0, 160], sizes = [16, 16], strides = [1, 1]} : vector<16x192xf32> to vector<16x16xf32>
    %78 = vector.shape_cast %77 : vector<16x16xf32> to vector<1x16x16xf32>
    %79 = arith.truncf %74 : vector<1x16x16xf32> to vector<1x16x16xbf16>
    %80 = arith.truncf %76 : vector<1x16x16xf32> to vector<1x16x16xbf16>
    "tpu.trace_start"() <{level = 10 : i32, message = "bqd,bkd->bqk"}> : () -> ()
    %cst_25 = arith.constant dense<0.000000e+00> : vector<1x16x16xf32>
    %81 = tpu.matmul %79, %80, %cst_25 {dimension_numbers = #tpu.dot_dimension_numbers<[2], [2], [1], [1], [0, 0, 0, 1, 1, 1], [0], [0]>} : vector<1x16x16xbf16>, vector<1x16x16xbf16>, vector<1x16x16xf32> -> vector<1x16x16xf32>
    "tpu.trace_stop"() : () -> ()
    %82 = vector.broadcast %12 : vector<1x1x16xf32> to vector<1x16x16xf32>
    %83 = arith.addf %81, %82 : vector<1x16x16xf32>
    %cst_26 = arith.constant dense<0xFF800000> : vector<1x16xf32>
    %84 = vector.multi_reduction <maximumf>, %83, %cst_26 [2] : vector<1x16x16xf32> to vector<1x16xf32>
    %85 = vector.shape_cast %84 : vector<1x16xf32> to vector<1x16x1xf32>
    %86 = vector.broadcast %85 : vector<1x16x1xf32> to vector<1x16x16xf32>
    %87 = arith.subf %83, %86 : vector<1x16x16xf32>
    %88 = math.exp %87 : vector<1x16x16xf32>
    %cst_27 = arith.constant dense<0.000000e+00> : vector<1x16xf32>
    %89 = vector.multi_reduction <add>, %88, %cst_27 [2] : vector<1x16x16xf32> to vector<1x16xf32>
    %90 = vector.shape_cast %89 : vector<1x16xf32> to vector<1x16x1xf32>
    %91 = tpu.reciprocal %90 {approx = true} : vector<1x16x1xf32> -> vector<1x16x1xf32>
    %92 = vector.broadcast %91 : vector<1x16x1xf32> to vector<1x16x16xf32>
    %93 = arith.mulf %88, %92 : vector<1x16x16xf32>
    %94 = arith.truncf %93 : vector<1x16x16xf32> to vector<1x16x16xbf16>
    %95 = arith.truncf %78 : vector<1x16x16xf32> to vector<1x16x16xbf16>
    "tpu.trace_start"() <{level = 10 : i32, message = "bqk,bkd->bqd"}> : () -> ()
    %cst_28 = arith.constant dense<0.000000e+00> : vector<1x16x16xf32>
    %96 = tpu.matmul %94, %95, %cst_28 {dimension_numbers = #tpu.dot_dimension_numbers<[2], [1], [1], [2], [0, 0, 0, 1, 1, 2], [0], [0]>} : vector<1x16x16xbf16>, vector<1x16x16xbf16>, vector<1x16x16xf32> -> vector<1x16x16xf32>
    "tpu.trace_stop"() : () -> ()
    %97 = vector.shape_cast %96 : vector<1x16x16xf32> to vector<16x16xf32>
    %98 = arith.truncf %97 : vector<16x16xf32> to vector<16x16xbf16>
    %c0_29 = arith.constant 0 : index
    %c32 = arith.constant 32 : index
    %99 = vector.load %arg20[%c0_29, %c32] : memref<16x64xbf16, #tpu.memory_space<vmem>>, vector<16x16xbf16>
    tpu.vector_store %arg20[%c0_29, %c32], %98 {strides = array<i32>} : memref<16x64xbf16, #tpu.memory_space<vmem>>, vector<16x16xbf16>,
    %100 = vector.extract_strided_slice %11 {offsets = [0, 48], sizes = [16, 16], strides = [1, 1]} : vector<16x192xf32> to vector<16x16xf32>
    %cst_30 = arith.constant 2.500000e-01 : f32
    %101 = vector.broadcast %cst_30 : f32 to vector<16x16xf32>
    %102 = arith.mulf %100, %101 : vector<16x16xf32>
    %103 = vector.shape_cast %102 : vector<16x16xf32> to vector<1x16x16xf32>
    %104 = vector.extract_strided_slice %11 {offsets = [0, 112], sizes = [16, 16], strides = [1, 1]} : vector<16x192xf32> to vector<16x16xf32>
    %105 = vector.shape_cast %104 : vector<16x16xf32> to vector<1x16x16xf32>
    %106 = vector.extract_strided_slice %11 {offsets = [0, 176], sizes = [16, 16], strides = [1, 1]} : vector<16x192xf32> to vector<16x16xf32>
    %107 = vector.shape_cast %106 : vector<16x16xf32> to vector<1x16x16xf32>
    %108 = arith.truncf %103 : vector<1x16x16xf32> to vector<1x16x16xbf16>
    %109 = arith.truncf %105 : vector<1x16x16xf32> to vector<1x16x16xbf16>
    "tpu.trace_start"() <{level = 10 : i32, message = "bqd,bkd->bqk"}> : () -> ()
    %cst_31 = arith.constant dense<0.000000e+00> : vector<1x16x16xf32>
    %110 = tpu.matmul %108, %109, %cst_31 {dimension_numbers = #tpu.dot_dimension_numbers<[2], [2], [1], [1], [0, 0, 0, 1, 1, 1], [0], [0]>} : vector<1x16x16xbf16>, vector<1x16x16xbf16>, vector<1x16x16xf32> -> vector<1x16x16xf32>
    "tpu.trace_stop"() : () -> ()
    %111 = vector.broadcast %12 : vector<1x1x16xf32> to vector<1x16x16xf32>
    %112 = arith.addf %110, %111 : vector<1x16x16xf32>
    %cst_32 = arith.constant dense<0xFF800000> : vector<1x16xf32>
    %113 = vector.multi_reduction <maximumf>, %112, %cst_32 [2] : vector<1x16x16xf32> to vector<1x16xf32>
    %114 = vector.shape_cast %113 : vector<1x16xf32> to vector<1x16x1xf32>
    %115 = vector.broadcast %114 : vector<1x16x1xf32> to vector<1x16x16xf32>
    %116 = arith.subf %112, %115 : vector<1x16x16xf32>
    %117 = math.exp %116 : vector<1x16x16xf32>
    %cst_33 = arith.constant dense<0.000000e+00> : vector<1x16xf32>
    %118 = vector.multi_reduction <add>, %117, %cst_33 [2] : vector<1x16x16xf32> to vector<1x16xf32>
    %119 = vector.shape_cast %118 : vector<1x16xf32> to vector<1x16x1xf32>
    %120 = tpu.reciprocal %119 {approx = true} : vector<1x16x1xf32> -> vector<1x16x1xf32>
    %121 = vector.broadcast %120 : vector<1x16x1xf32> to vector<1x16x16xf32>
    %122 = arith.mulf %117, %121 : vector<1x16x16xf32>
    %123 = arith.truncf %122 : vector<1x16x16xf32> to vector<1x16x16xbf16>
    %124 = arith.truncf %107 : vector<1x16x16xf32> to vector<1x16x16xbf16>
    "tpu.trace_start"() <{level = 10 : i32, message = "bqk,bkd->bqd"}> : () -> ()
    %cst_34 = arith.constant dense<0.000000e+00> : vector<1x16x16xf32>
    %125 = tpu.matmul %123, %124, %cst_34 {dimension_numbers = #tpu.dot_dimension_numbers<[2], [1], [1], [2], [0, 0, 0, 1, 1, 2], [0], [0]>} : vector<1x16x16xbf16>, vector<1x16x16xbf16>, vector<1x16x16xf32> -> vector<1x16x16xf32>
    "tpu.trace_stop"() : () -> ()
    %126 = vector.shape_cast %125 : vector<1x16x16xf32> to vector<16x16xf32>
    %127 = arith.truncf %126 : vector<16x16xf32> to vector<16x16xbf16>
    %c0_35 = arith.constant 0 : index
    %c48 = arith.constant 48 : index
    %128 = vector.load %arg20[%c0_35, %c48] : memref<16x64xbf16, #tpu.memory_space<vmem>>, vector<16x16xbf16>
    tpu.vector_store %arg20[%c0_35, %c48], %127 {strides = array<i32>} : memref<16x64xbf16, #tpu.memory_space<vmem>>, vector<16x16xbf16>,
    %c0_36 = arith.constant 0 : index
    %c0_37 = arith.constant 0 : index
    %129 = vector.load %arg20[%c0_36, %c0_37] : memref<16x64xbf16, #tpu.memory_space<vmem>>, vector<16x64xbf16>
    %c0_38 = arith.constant 0 : index
    %c0_39 = arith.constant 0 : index
    %c0_40 = arith.constant 0 : index
    %130 = vector.load %arg8[%c0_38, %c0_39, %c0_40] : memref<1x64x64xbf16, #tpu.memory_space<vmem>>, vector<1x64x64xbf16>
    %131 = vector.shape_cast %130 : vector<1x64x64xbf16> to vector<64x64xbf16>
    %cst_41 = arith.constant dense<0.000000e+00> : vector<16x64xf32>
    %132 = tpu.matmul %129, %131, %cst_41 {dimension_numbers = #tpu.dot_dimension_numbers<[1], [0], [0], [1], [0, 0, 1, 1], [], []>} : vector<16x64xbf16>, vector<64x64xbf16>, vector<16x64xf32> -> vector<16x64xf32>
    %c0_42 = arith.constant 0 : index
    %c0_43 = arith.constant 0 : index
    %c0_44 = arith.constant 0 : index
    %133 = vector.load %arg9[%c0_42, %c0_43, %c0_44] : memref<1x1x64xf32, #tpu.memory_space<vmem>>, vector<1x1x64xf32>
    %134 = vector.shape_cast %133 : vector<1x1x64xf32> to vector<1x64xf32>
    %135 = vector.broadcast %134 : vector<1x64xf32> to vector<16x64xf32>
    %136 = arith.addf %132, %135 : vector<16x64xf32>
    %137 = arith.addf %3, %136 : vector<16x64xf32>
    %c0_45 = arith.constant 0 : index
    %c0_46 = arith.constant 0 : index
    %c0_47 = arith.constant 0 : index
    %138 = vector.load %arg10[%c0_45, %c0_46, %c0_47] : memref<1x1x64xf32, #tpu.memory_space<vmem>>, vector<1x1x64xf32>
    %139 = vector.shape_cast %138 : vector<1x1x64xf32> to vector<1x64xf32>
    %c0_48 = arith.constant 0 : index
    %c0_49 = arith.constant 0 : index
    %c0_50 = arith.constant 0 : index
    %140 = vector.load %arg11[%c0_48, %c0_49, %c0_50] : memref<1x1x64xf32, #tpu.memory_space<vmem>>, vector<1x1x64xf32>
    %141 = vector.shape_cast %140 : vector<1x1x64xf32> to vector<1x64xf32>
    %cst_51 = arith.constant dense<0.000000e+00> : vector<16xf32>
    %142 = vector.multi_reduction <add>, %137, %cst_51 [1] : vector<16x64xf32> to vector<16xf32>
    %143 = vector.shape_cast %142 : vector<16xf32> to vector<16x1xf32>
    %cst_52 = arith.constant 6.400000e+01 : f32
    %144 = vector.broadcast %cst_52 : f32 to vector<16x1xf32>
    %145 = arith.divf %143, %144 : vector<16x1xf32>
    %146 = vector.broadcast %145 : vector<16x1xf32> to vector<16x64xf32>
    %147 = arith.subf %137, %146 : vector<16x64xf32>
    %148 = arith.mulf %147, %147 : vector<16x64xf32>
    %cst_53 = arith.constant dense<0.000000e+00> : vector<16xf32>
    %149 = vector.multi_reduction <add>, %148, %cst_53 [1] : vector<16x64xf32> to vector<16xf32>
    %150 = vector.shape_cast %149 : vector<16xf32> to vector<16x1xf32>
    %cst_54 = arith.constant 6.400000e+01 : f32
    %151 = vector.broadcast %cst_54 : f32 to vector<16x1xf32>
    %152 = arith.divf %150, %151 : vector<16x1xf32>
    %153 = vector.broadcast %145 : vector<16x1xf32> to vector<16x64xf32>
    %154 = arith.subf %137, %153 : vector<16x64xf32>
    %cst_55 = arith.constant 1.000000e-07 : f32
    %155 = vector.broadcast %cst_55 : f32 to vector<16x1xf32>
    %156 = arith.addf %152, %155 : vector<16x1xf32>
    %157 = math.rsqrt %156 : vector<16x1xf32>
    %158 = vector.broadcast %157 : vector<16x1xf32> to vector<16x64xf32>
    %159 = arith.mulf %154, %158 : vector<16x64xf32>
    %160 = vector.broadcast %139 : vector<1x64xf32> to vector<16x64xf32>
    %161 = arith.mulf %159, %160 : vector<16x64xf32>
    %162 = vector.broadcast %141 : vector<1x64xf32> to vector<16x64xf32>
    %163 = arith.addf %161, %162 : vector<16x64xf32>
    %164 = arith.truncf %163 : vector<16x64xf32> to vector<16x64xbf16>
    %c0_56 = arith.constant 0 : index
    %c0_57 = arith.constant 0 : index
    %c0_58 = arith.constant 0 : index
    %165 = vector.load %arg12[%c0_56, %c0_57, %c0_58] : memref<1x64x128xbf16, #tpu.memory_space<vmem>>, vector<1x64x128xbf16>
    %166 = vector.shape_cast %165 : vector<1x64x128xbf16> to vector<64x128xbf16>
    %cst_59 = arith.constant dense<0.000000e+00> : vector<16x128xf32>
    %167 = tpu.matmul %164, %166, %cst_59 {dimension_numbers = #tpu.dot_dimension_numbers<[1], [0], [0], [1], [0, 0, 1, 1], [], []>} : vector<16x64xbf16>, vector<64x128xbf16>, vector<16x128xf32> -> vector<16x128xf32>
    %c0_60 = arith.constant 0 : index
    %c0_61 = arith.constant 0 : index
    %c0_62 = arith.constant 0 : index
    %168 = vector.load %arg13[%c0_60, %c0_61, %c0_62] : memref<1x1x128xf32, #tpu.memory_space<vmem>>, vector<1x1x128xf32>
    %169 = vector.shape_cast %168 : vector<1x1x128xf32> to vector<1x128xf32>
    %170 = vector.broadcast %169 : vector<1x128xf32> to vector<16x128xf32>
    %171 = arith.addf %167, %170 : vector<16x128xf32>
    %cst_63 = arith.constant 5.000000e-01 : f32
    %172 = vector.broadcast %cst_63 : f32 to vector<16x128xf32>
    %173 = arith.mulf %172, %171 : vector<16x128xf32>
    %cst_64 = arith.constant 4.471500e-02 : f32
    %174 = vector.broadcast %cst_64 : f32 to vector<16x128xf32>
    %175 = arith.mulf %174, %171 : vector<16x128xf32>
    %176 = arith.mulf %175, %171 : vector<16x128xf32>
    %177 = arith.mulf %176, %171 : vector<16x128xf32>
    %178 = arith.addf %171, %177 : vector<16x128xf32>
    %cst_65 = arith.constant 0.797884583 : f32
    %179 = vector.broadcast %cst_65 : f32 to vector<16x128xf32>
    %180 = arith.mulf %179, %178 : vector<16x128xf32>
    %181 = math.tanh %180 : vector<16x128xf32>
    %cst_66 = arith.constant 1.000000e+00 : f32
    %182 = vector.broadcast %cst_66 : f32 to vector<16x128xf32>
    %183 = arith.addf %182, %181 : vector<16x128xf32>
    %184 = arith.mulf %173, %183 : vector<16x128xf32>
    %185 = arith.truncf %184 : vector<16x128xf32> to vector<16x128xbf16>
    %c0_67 = arith.constant 0 : index
    %c0_68 = arith.constant 0 : index
    %c0_69 = arith.constant 0 : index
    %186 = vector.load %arg14[%c0_67, %c0_68, %c0_69] : memref<1x128x64xbf16, #tpu.memory_space<vmem>>, vector<1x128x64xbf16>
    %187 = vector.shape_cast %186 : vector<1x128x64xbf16> to vector<128x64xbf16>
    %cst_70 = arith.constant dense<0.000000e+00> : vector<16x64xf32>
    %188 = tpu.matmul %185, %187, %cst_70 {dimension_numbers = #tpu.dot_dimension_numbers<[1], [0], [0], [1], [0, 0, 1, 1], [], []>} : vector<16x128xbf16>, vector<128x64xbf16>, vector<16x64xf32> -> vector<16x64xf32>
    %c0_71 = arith.constant 0 : index
    %c0_72 = arith.constant 0 : index
    %c0_73 = arith.constant 0 : index
    %189 = vector.load %arg15[%c0_71, %c0_72, %c0_73] : memref<1x1x64xf32, #tpu.memory_space<vmem>>, vector<1x1x64xf32>
    %190 = vector.shape_cast %189 : vector<1x1x64xf32> to vector<1x64xf32>
    %191 = vector.broadcast %190 : vector<1x64xf32> to vector<16x64xf32>
    %192 = arith.addf %188, %191 : vector<16x64xf32>
    %193 = arith.addf %163, %192 : vector<16x64xf32>
    %c0_74 = arith.constant 0 : index
    %c0_75 = arith.constant 0 : index
    %c0_76 = arith.constant 0 : index
    %194 = vector.load %arg16[%c0_74, %c0_75, %c0_76] : memref<1x1x64xf32, #tpu.memory_space<vmem>>, vector<1x1x64xf32>
    %195 = vector.shape_cast %194 : vector<1x1x64xf32> to vector<1x64xf32>
    %c0_77 = arith.constant 0 : index
    %c0_78 = arith.constant 0 : index
    %c0_79 = arith.constant 0 : index
    %196 = vector.load %arg17[%c0_77, %c0_78, %c0_79] : memref<1x1x64xf32, #tpu.memory_space<vmem>>, vector<1x1x64xf32>
    %197 = vector.shape_cast %196 : vector<1x1x64xf32> to vector<1x64xf32>
    %cst_80 = arith.constant dense<0.000000e+00> : vector<16xf32>
    %198 = vector.multi_reduction <add>, %193, %cst_80 [1] : vector<16x64xf32> to vector<16xf32>
    %199 = vector.shape_cast %198 : vector<16xf32> to vector<16x1xf32>
    %cst_81 = arith.constant 6.400000e+01 : f32
    %200 = vector.broadcast %cst_81 : f32 to vector<16x1xf32>
    %201 = arith.divf %199, %200 : vector<16x1xf32>
    %202 = vector.broadcast %201 : vector<16x1xf32> to vector<16x64xf32>
    %203 = arith.subf %193, %202 : vector<16x64xf32>
    %204 = arith.mulf %203, %203 : vector<16x64xf32>
    %cst_82 = arith.constant dense<0.000000e+00> : vector<16xf32>
    %205 = vector.multi_reduction <add>, %204, %cst_82 [1] : vector<16x64xf32> to vector<16xf32>
    %206 = vector.shape_cast %205 : vector<16xf32> to vector<16x1xf32>
    %cst_83 = arith.constant 6.400000e+01 : f32
    %207 = vector.broadcast %cst_83 : f32 to vector<16x1xf32>
    %208 = arith.divf %206, %207 : vector<16x1xf32>
    %209 = vector.broadcast %201 : vector<16x1xf32> to vector<16x64xf32>
    %210 = arith.subf %193, %209 : vector<16x64xf32>
    %cst_84 = arith.constant 1.000000e-07 : f32
    %211 = vector.broadcast %cst_84 : f32 to vector<16x1xf32>
    %212 = arith.addf %208, %211 : vector<16x1xf32>
    %213 = math.rsqrt %212 : vector<16x1xf32>
    %214 = vector.broadcast %213 : vector<16x1xf32> to vector<16x64xf32>
    %215 = arith.mulf %210, %214 : vector<16x64xf32>
    %216 = vector.broadcast %195 : vector<1x64xf32> to vector<16x64xf32>
    %217 = arith.mulf %215, %216 : vector<16x64xf32>
    %218 = vector.broadcast %197 : vector<1x64xf32> to vector<16x64xf32>
    %219 = arith.addf %217, %218 : vector<16x64xf32>
    %c0_85 = arith.constant 0 : index
    %c0_86 = arith.constant 0 : index
    %220 = vector.load %arg19[%c0_85, %c0_86] : memref<16x64xf32, #tpu.memory_space<vmem>>, vector<16x64xf32>
    tpu.vector_store %arg19[%c0_85, %c0_86], %219 {strides = array<i32>} : memref<16x64xf32, #tpu.memory_space<vmem>>, vector<16x64xf32>,
    %c1_i32 = arith.constant 1 : i32
    %221 = arith.cmpi eq, %arg1, %c1_i32 : i32
    %222 = arith.extui %221 : i1 to i32
    %c0_i32_87 = arith.constant 0 : i32
    %223 = arith.cmpi ne, %222, %c0_i32_87 : i32
    scf.if %223 {
      %c0_88 = arith.constant 0 : index
      %c0_89 = arith.constant 0 : index
      %224 = vector.load %arg18[%c0_88, %c0_89] : memref<16x64xf32, #tpu.memory_space<vmem>>, vector<16x64xf32>
      tpu.vector_store %arg18[%c0_88, %c0_89], %219 {strides = array<i32>} : memref<16x64xf32, #tpu.memory_space<vmem>>, vector<16x64xf32>,
    } else {
    }
    return
  }
  func.func @transform_1(%arg0: i32, %arg1: i32) -> (i32, i32, i32) {
    %c0_i32 = arith.constant 0 : i32
    %c0_i32_0 = arith.constant 0 : i32
    %c0_i32_1 = arith.constant 0 : i32
    return %arg0, %c0_i32, %c0_i32_0 : i32, i32, i32
  }
  func.func @transform_2(%arg0: i32, %arg1: i32) -> (i32, i32) {
    %c0_i32 = arith.constant 0 : i32
    %c0_i32_0 = arith.constant 0 : i32
    %c0_i32_1 = arith.constant 0 : i32
    return %c0_i32, %c0_i32_0 : i32, i32
  }
  func.func @transform_3(%arg0: i32, %arg1: i32) -> (i32, i32) {
    %c0_i32 = arith.constant 0 : i32
    %c0_i32_0 = arith.constant 0 : i32
    %c0_i32_1 = arith.constant 0 : i32
    return %c0_i32, %c0_i32_0 : i32, i32
  }
  func.func @transform_4(%arg0: i32, %arg1: i32) -> (i32, i32, i32) {
    %c0_i32 = arith.constant 0 : i32
    %c0_i32_0 = arith.constant 0 : i32
    %c0_i32_1 = arith.constant 0 : i32
    return %arg1, %c0_i32, %c0_i32_0 : i32, i32, i32
  }
  func.func @transform_5(%arg0: i32, %arg1: i32) -> (i32, i32, i32) {
    %c0_i32 = arith.constant 0 : i32
    %c0_i32_0 = arith.constant 0 : i32
    %c0_i32_1 = arith.constant 0 : i32
    return %arg1, %c0_i32, %c0_i32_0 : i32, i32, i32
  }
  func.func @transform_6(%arg0: i32, %arg1: i32) -> (i32, i32, i32) {
    %c0_i32 = arith.constant 0 : i32
    %c0_i32_0 = arith.constant 0 : i32
    %c0_i32_1 = arith.constant 0 : i32
    return %arg1, %c0_i32, %c0_i32_0 : i32, i32, i32
  }
  func.func @transform_7(%arg0: i32, %arg1: i32) -> (i32, i32, i32) {
    %c0_i32 = arith.constant 0 : i32
    %c0_i32_0 = arith.constant 0 : i32
    %c0_i32_1 = arith.constant 0 : i32
    return %arg1, %c0_i32, %c0_i32_0 : i32, i32, i32
  }
  func.func @transform_8(%arg0: i32, %arg1: i32) -> (i32, i32, i32) {
    %c0_i32 = arith.constant 0 : i32
    %c0_i32_0 = arith.constant 0 : i32
    %c0_i32_1 = arith.constant 0 : i32
    return %arg1, %c0_i32, %c0_i32_0 : i32, i32, i32
  }
  func.func @transform_9(%arg0: i32, %arg1: i32) -> (i32, i32, i32) {
    %c0_i32 = arith.constant 0 : i32
    %c0_i32_0 = arith.constant 0 : i32
    %c0_i32_1 = arith.constant 0 : i32
    return %arg1, %c0_i32, %c0_i32_0 : i32, i32, i32
  }
  func.func @transform_10(%arg0: i32, %arg1: i32) -> (i32, i32, i32) {
    %c0_i32 = arith.constant 0 : i32
    %c0_i32_0 = arith.constant 0 : i32
    %c0_i32_1 = arith.constant 0 : i32
    return %arg1, %c0_i32, %c0_i32_0 : i32, i32, i32
  }
  func.func @transform_11(%arg0: i32, %arg1: i32) -> (i32, i32, i32) {
    %c0_i32 = arith.constant 0 : i32
    %c0_i32_0 = arith.constant 0 : i32
    %c0_i32_1 = arith.constant 0 : i32
    return %arg1, %c0_i32, %c0_i32_0 : i32, i32, i32
  }
  func.func @transform_12(%arg0: i32, %arg1: i32) -> (i32, i32, i32) {
    %c0_i32 = arith.constant 0 : i32
    %c0_i32_0 = arith.constant 0 : i32
    %c0_i32_1 = arith.constant 0 : i32
    return %arg1, %c0_i32, %c0_i32_0 : i32, i32, i32
  }
  func.func @transform_13(%arg0: i32, %arg1: i32) -> (i32, i32, i32) {
    %c0_i32 = arith.constant 0 : i32
    %c0_i32_0 = arith.constant 0 : i32
    %c0_i32_1 = arith.constant 0 : i32
    return %arg1, %c0_i32, %c0_i32_0 : i32, i32, i32
  }
  func.func @transform_14(%arg0: i32, %arg1: i32) -> (i32, i32, i32) {
    %c0_i32 = arith.constant 0 : i32
    %c0_i32_0 = arith.constant 0 : i32
    %c0_i32_1 = arith.constant 0 : i32
    return %arg1, %c0_i32, %c0_i32_0 : i32, i32, i32
  }
  func.func @transform_15(%arg0: i32, %arg1: i32) -> (i32, i32, i32) {
    %c0_i32 = arith.constant 0 : i32
    %c0_i32_0 = arith.constant 0 : i32
    %c0_i32_1 = arith.constant 0 : i32
    return %arg1, %c0_i32, %c0_i32_0 : i32, i32, i32
  }
  func.func @transform_16(%arg0: i32, %arg1: i32) -> (i32, i32) {
    %c0_i32 = arith.constant 0 : i32
    %c0_i32_0 = arith.constant 0 : i32
    return %arg0, %c0_i32 : i32, i32
  }
}

</mosaic_0001>

<llo_original>
// kernel: deberta_classifier_forward.1
$region0: #{deberta_classifier_forward.1}
  #allocation0 [shape = 'u32[]', space=smem, size = 0x4, offset = 0x4, fixed_abs, tag = 'smem constant byte address 0x4 - core index']
  #allocation1 [shape = 'u32[144,128]{1,0:T(1,128)}', space=vmem, size = 0x12000, scoped, tag = 'internal scratch']
  #allocation2 [shape = 'f32[16,64]{1,0:T(8,128)}', space=vmem, size = 0x2000, scoped, tag = 'scratch operand']
  #allocation3 [shape = 'bf16[16,64]{1,0:T(16,128)(2,1)}', space=vmem, size = 0x1000, scoped, tag = 'scratch operand']
  #allocation4 [shape = 's32[1]{0}', space=sflag, size = 0x4, scoped, tag = 'scratch operand']
  #allocation5 [shape = 's32[]', space=sflag, size = 0x4, offset = 0, fixed_abs, tag = 'sflag constant byte address 0x0 - dummy sync flag']
  %s0 = inlined_call_operand.vmem [shape: f32[32,64], index: 0, kind: input, shape index: {}]
  %s1 = inlined_call_operand.vmem [shape: f32[2,1,16], index: 1, kind: input, shape index: {}]
  %s2 = inlined_call_operand.vmem [shape: f32[1,64], index: 2, kind: input, shape index: {}]
  %s3 = inlined_call_operand.vmem [shape: f32[1,64], index: 3, kind: input, shape index: {}]
  %s4 = inlined_call_operand.vmem [shape: bf16[2,64,192], index: 4, kind: input, shape index: {}]
  %s5 = inlined_call_operand.vmem [shape: f32[2,1,192], index: 5, kind: input, shape index: {}]
  %s6 = inlined_call_operand.vmem [shape: bf16[2,64,64], index: 6, kind: input, shape index: {}]
  %s7 = inlined_call_operand.vmem [shape: f32[2,1,64], index: 7, kind: input, shape index: {}]
  %s8 = inlined_call_operand.vmem [shape: f32[2,1,64], index: 8, kind: input, shape index: {}]
  %s9 = inlined_call_operand.vmem [shape: f32[2,1,64], index: 9, kind: input, shape index: {}]
  %s10 = inlined_call_operand.vmem [shape: bf16[2,64,128], index: 10, kind: input, shape index: {}]
  %s11 = inlined_call_operand.vmem [shape: f32[2,1,128], index: 11, kind: input, shape index: {}]
  %s12 = inlined_call_operand.vmem [shape: bf16[2,128,64], index: 12, kind: input, shape index: {}]
  %s13 = inlined_call_operand.vmem [shape: f32[2,1,64], index: 13, kind: input, shape index: {}]
  %s14 = inlined_call_operand.vmem [shape: f32[2,1,64], index: 14, kind: input, shape index: {}]
  %s15 = inlined_call_operand.vmem [shape: f32[2,1,64], index: 15, kind: input, shape index: {}]
  %s16 = inlined_call_operand.vmem [shape: f32[32,64], index: 16, kind: output, shape index: {}]
  %s17 = sld [smem:[#allocation0]]
  $region135: #{deberta_classifier_forward.1} parent=0
    _
  %s19 = ssub.s32 1, %s17
  %s20 = scalar_select 0, %s19, %s17
  loop: start=0, step=1, limit=6
  $region2: #{deberta_classifier_forward.1} parent=0 // loop_pre_header
    _
  $region3: #{deberta_classifier_forward.1} parent=0 // loop_header
    %s22 = sphi 0, %s26
    %p23 = scmp.ge.s32.totalorder %s22, 6
    %s29 = sphi 0, %s41
    %s30 = sphi 0, %s37
    %s31 = sphi 0, %s29
    %s32 = sphi 0, %s30
    %s33 = sphi 0, %s31
    %s34 = sphi 0, %s32
    %s44 = sphi 0, %s46
    %s47 = sphi 0, %s44
    %s48 = sphi 0, %s47
    %s64 = sphi 0, %s48
    %s68 = sphi 0, %s68
    %s70 = sphi 0, %s68
    %s71 = sphi 0, %s70
    %s85 = sphi 0, %s71
    %s89 = sphi 0, %s89
    %s91 = sphi 0, %s89
    %s92 = sphi 0, %s91
    %s106 = sphi 0, %s92
    %s112 = sphi 0, %s114
    %s115 = sphi 0, %s112
    %s116 = sphi 0, %s115
    %s132 = sphi 0, %s116
    %s138 = sphi 0, %s140
    %s141 = sphi 0, %s138
    %s142 = sphi 0, %s141
    %s158 = sphi 0, %s142
    %s164 = sphi 0, %s166
    %s167 = sphi 0, %s164
    %s168 = sphi 0, %s167
    %s184 = sphi 0, %s168
    %s190 = sphi 0, %s192
    %s193 = sphi 0, %s190
    %s194 = sphi 0, %s193
    %s210 = sphi 0, %s194
    %s216 = sphi 0, %s218
    %s219 = sphi 0, %s216
    %s220 = sphi 0, %s219
    %s236 = sphi 0, %s220
    %s242 = sphi 0, %s244
    %s245 = sphi 0, %s242
    %s246 = sphi 0, %s245
    %s262 = sphi 0, %s246
    %s268 = sphi 0, %s270
    %s271 = sphi 0, %s268
    %s272 = sphi 0, %s271
    %s288 = sphi 0, %s272
    %s294 = sphi 0, %s296
    %s297 = sphi 0, %s294
    %s298 = sphi 0, %s297
    %s314 = sphi 0, %s298
    %s320 = sphi 0, %s322
    %s323 = sphi 0, %s320
    %s324 = sphi 0, %s323
    %s340 = sphi 0, %s324
    %s346 = sphi 0, %s348
    %s349 = sphi 0, %s346
    %s350 = sphi 0, %s349
    %s366 = sphi 0, %s350
    %s372 = sphi 0, %s374
    %s375 = sphi 0, %s372
    %s376 = sphi 0, %s375
    %s392 = sphi 0, %s376
    %s398 = sphi 0, %s400
    %s401 = sphi 0, %s398
    %s402 = sphi 0, %s401
    %s418 = sphi 0, %s402
    %s424 = sphi 0, %s426
    %s427 = sphi 0, %s424
    %s428 = sphi 0, %s427
    %s444 = sphi 0, %s428
  $region4: #{deberta_classifier_forward.1} parent=0 // loop_header_branch
    %25 = sbr.rel (%p23) target = $region8
  $region5: #{deberta_classifier_forward.1} parent=0 // loop_body
    %s27 = ssub.s32 %s22, 1
    %s28 = ssub.s32 %s22, 2
    %s35 = sadd.s32 1, %s30
    %p36 = scmp.ge.s32.totalorder %s35, 2
    %s37 = scalar_select %p36, 0, %s35
    %s38 = sadd.s32 1, %s29
    %s39 = scalar_select %p36, %s38, %s29
    %p40 = scmp.ge.s32.totalorder %s39, 2
    %s41 = scalar_select %p40, 0, %s39
    %s42 = ssub.s32 %s29, %s41
    %p43 = scmp.eq.s32.totalorder %s42, 0
    %s45 = sadd.s32 %s44, 1
    %s46 = scalar_select %p43, %s44, %s45
    %p49 = pneg %p43
    %p50 = scmp.eq.s32.totalorder %s22, 3
    %p51 = por %p49, %p50
    %p52 = scmp.ne.s32.totalorder %s44, %s47
    %p53 = scmp.eq.s32.totalorder %s22, 0
    %p54 = por %p52, %p53
    %p55 = scmp.ne.s32.totalorder %s44, %s47
    %p56 = scmp.eq.s32.totalorder %s27, 3
    %p57 = por %p55, %p56
    %p58 = scmp.ne.s32.totalorder %s47, %s48
    %p59 = scmp.eq.s32.totalorder %s27, 0
    %p60 = por %p58, %p59
    %p61 = scmp.ne.s32.totalorder %s47, %s48
    %p62 = scmp.eq.s32.totalorder %s28, 3
    %p63 = por %p61, %p62
    %p65 = scmp.ne.s32.totalorder %s48, %s64
    %p66 = scmp.eq.s32.totalorder %s28, 0
    %p67 = por %p65, %p66
    %s69 = sadd.s32 %s68, 1
    %p72 = scmp.eq.s32.totalorder %s22, 3
    %p73 = scmp.ne.s32.totalorder %s68, %s70
    %p74 = scmp.eq.s32.totalorder %s22, 0
    %p75 = por %p73, %p74
    %p76 = scmp.ne.s32.totalorder %s68, %s70
    %p77 = scmp.eq.s32.totalorder %s27, 3
    %p78 = por %p76, %p77
    %p79 = scmp.ne.s32.totalorder %s70, %s71
    %p80 = scmp.eq.s32.totalorder %s27, 0
    %p81 = por %p79, %p80
    %p82 = scmp.ne.s32.totalorder %s70, %s71
    %p83 = scmp.eq.s32.totalorder %s28, 3
    %p84 = por %p82, %p83
    %p86 = scmp.ne.s32.totalorder %s71, %s85
    %p87 = scmp.eq.s32.totalorder %s28, 0
    %p88 = por %p86, %p87
    %s90 = sadd.s32 %s89, 1
    %p93 = scmp.eq.s32.totalorder %s22, 3
    %p94 = scmp.ne.s32.totalorder %s89, %s91
    %p95 = scmp.eq.s32.totalorder %s22, 0
    %p96 = por %p94, %p95
    %p97 = scmp.ne.s32.totalorder %s89, %s91
    %p98 = scmp.eq.s32.totalorder %s27, 3
    %p99 = por %p97, %p98
    %p100 = scmp.ne.s32.totalorder %s91, %s92
    %p101 = scmp.eq.s32.totalorder %s27, 0
    %p102 = por %p100, %p101
    %p103 = scmp.ne.s32.totalorder %s91, %s92
    %p104 = scmp.eq.s32.totalorder %s28, 3
    %p105 = por %p103, %p104
    %p107 = scmp.ne.s32.totalorder %s92, %s106
    %p108 = scmp.eq.s32.totalorder %s28, 0
    %p109 = por %p107, %p108
    %s110 = ssub.s32 %s30, %s37
    %p111 = scmp.eq.s32.totalorder %s110, 0
    %s113 = sadd.s32 %s112, 1
    %s114 = scalar_select %p111, %s112, %s113
    %p117 = pneg %p111
    %p118 = scmp.eq.s32.totalorder %s22, 3
    %p119 = por %p117, %p118
    %p120 = scmp.ne.s32.totalorder %s112, %s115
    %p121 = scmp.eq.s32.totalorder %s22, 0
    %p122 = por %p120, %p121
    %p123 = scmp.ne.s32.totalorder %s112, %s115
    %p124 = scmp.eq.s32.totalorder %s27, 3
    %p125 = por %p123, %p124
    %p126 = scmp.ne.s32.totalorder %s115, %s116
    %p127 = scmp.eq.s32.totalorder %s27, 0
    %p128 = por %p126, %p127
    %p129 = scmp.ne.s32.totalorder %s115, %s116
    %p130 = scmp.eq.s32.totalorder %s28, 3
    %p131 = por %p129, %p130
    %p133 = scmp.ne.s32.totalorder %s116, %s132
    %p134 = scmp.eq.s32.totalorder %s28, 0
    %p135 = por %p133, %p134
    %s136 = ssub.s32 %s30, %s37
    %p137 = scmp.eq.s32.totalorder %s136, 0
    %s139 = sadd.s32 %s138, 1
    %s140 = scalar_select %p137, %s138, %s139
    %p143 = pneg %p137
    %p144 = scmp.eq.s32.totalorder %s22, 3
    %p145 = por %p143, %p144
    %p146 = scmp.ne.s32.totalorder %s138, %s141
    %p147 = scmp.eq.s32.totalorder %s22, 0
    %p148 = por %p146, %p147
    %p149 = scmp.ne.s32.totalorder %s138, %s141
    %p150 = scmp.eq.s32.totalorder %s27, 3
    %p151 = por %p149, %p150
    %p152 = scmp.ne.s32.totalorder %s141, %s142
    %p153 = scmp.eq.s32.totalorder %s27, 0
    %p154 = por %p152, %p153
    %p155 = scmp.ne.s32.totalorder %s141, %s142
    %p156 = scmp.eq.s32.totalorder %s28, 3
    %p157 = por %p155, %p156
    %p159 = scmp.ne.s32.totalorder %s142, %s158
    %p160 = scmp.eq.s32.totalorder %s28, 0
    %p161 = por %p159, %p160
    %s162 = ssub.s32 %s30, %s37
    %p163 = scmp.eq.s32.totalorder %s162, 0
    %s165 = sadd.s32 %s164, 1
    %s166 = scalar_select %p163, %s164, %s165
    %p169 = pneg %p163
    %p170 = scmp.eq.s32.totalorder %s22, 3
    %p171 = por %p169, %p170
    %p172 = scmp.ne.s32.totalorder %s164, %s167
    %p173 = scmp.eq.s32.totalorder %s22, 0
    %p174 = por %p172, %p173
    %p175 = scmp.ne.s32.totalorder %s164, %s167
    %p176 = scmp.eq.s32.totalorder %s27, 3
    %p177 = por %p175, %p176
    %p178 = scmp.ne.s32.totalorder %s167, %s168
    %p179 = scmp.eq.s32.totalorder %s27, 0
    %p180 = por %p178, %p179
    %p181 = scmp.ne.s32.totalorder %s167, %s168
    %p182 = scmp.eq.s32.totalorder %s28, 3
    %p183 = por %p181, %p182
    %p185 = scmp.ne.s32.totalorder %s168, %s184
    %p186 = scmp.eq.s32.totalorder %s28, 0
    %p187 = por %p185, %p186
    %s188 = ssub.s32 %s30, %s37
    %p189 = scmp.eq.s32.totalorder %s188, 0
    %s191 = sadd.s32 %s190, 1
    %s192 = scalar_select %p189, %s190, %s191
    %p195 = pneg %p189
    %p196 = scmp.eq.s32.totalorder %s22, 3
    %p197 = por %p195, %p196
    %p198 = scmp.ne.s32.totalorder %s190, %s193
    %p199 = scmp.eq.s32.totalorder %s22, 0
    %p200 = por %p198, %p199
    %p201 = scmp.ne.s32.totalorder %s190, %s193
    %p202 = scmp.eq.s32.totalorder %s27, 3
    %p203 = por %p201, %p202
    %p204 = scmp.ne.s32.totalorder %s193, %s194
    %p205 = scmp.eq.s32.totalorder %s27, 0
    %p206 = por %p204, %p205
    %p207 = scmp.ne.s32.totalorder %s193, %s194
    %p208 = scmp.eq.s32.totalorder %s28, 3
    %p209 = por %p207, %p208
    %p211 = scmp.ne.s32.totalorder %s194, %s210
    %p212 = scmp.eq.s32.totalorder %s28, 0
    %p213 = por %p211, %p212
    %s214 = ssub.s32 %s30, %s37
    %p215 = scmp.eq.s32.totalorder %s214, 0
    %s217 = sadd.s32 %s216, 1
    %s218 = scalar_select %p215, %s216, %s217
    %p221 = pneg %p215
    %p222 = scmp.eq.s32.totalorder %s22, 3
    %p223 = por %p221, %p222
    %p224 = scmp.ne.s32.totalorder %s216, %s219
    %p225 = scmp.eq.s32.totalorder %s22, 0
    %p226 = por %p224, %p225
    %p227 = scmp.ne.s32.totalorder %s216, %s219
    %p228 = scmp.eq.s32.totalorder %s27, 3
    %p229 = por %p227, %p228
    %p230 = scmp.ne.s32.totalorder %s219, %s220
    %p231 = scmp.eq.s32.totalorder %s27, 0
    %p232 = por %p230, %p231
    %p233 = scmp.ne.s32.totalorder %s219, %s220
    %p234 = scmp.eq.s32.totalorder %s28, 3
    %p235 = por %p233, %p234
    %p237 = scmp.ne.s32.totalorder %s220, %s236
    %p238 = scmp.eq.s32.totalorder %s28, 0
    %p239 = por %p237, %p238
    %s240 = ssub.s32 %s30, %s37
    %p241 = scmp.eq.s32.totalorder %s240, 0
    %s243 = sadd.s32 %s242, 1
    %s244 = scalar_select %p241, %s242, %s243
    %p247 = pneg %p241
    %p248 = scmp.eq.s32.totalorder %s22, 3
    %p249 = por %p247, %p248
    %p250 = scmp.ne.s32.totalorder %s242, %s245
    %p251 = scmp.eq.s32.totalorder %s22, 0
    %p252 = por %p250, %p251
    %p253 = scmp.ne.s32.totalorder %s242, %s245
    %p254 = scmp.eq.s32.totalorder %s27, 3
    %p255 = por %p253, %p254
    %p256 = scmp.ne.s32.totalorder %s245, %s246
    %p257 = scmp.eq.s32.totalorder %s27, 0
    %p258 = por %p256, %p257
    %p259 = scmp.ne.s32.totalorder %s245, %s246
    %p260 = scmp.eq.s32.totalorder %s28, 3
    %p261 = por %p259, %p260
    %p263 = scmp.ne.s32.totalorder %s246, %s262
    %p264 = scmp.eq.s32.totalorder %s28, 0
    %p265 = por %p263, %p264
    %s266 = ssub.s32 %s30, %s37
    %p267 = scmp.eq.s32.totalorder %s266, 0
    %s269 = sadd.s32 %s268, 1
    %s270 = scalar_select %p267, %s268, %s269
    %p273 = pneg %p267
    %p274 = scmp.eq.s32.totalorder %s22, 3
    %p275 = por %p273, %p274
    %p276 = scmp.ne.s32.totalorder %s268, %s271
    %p277 = scmp.eq.s32.totalorder %s22, 0
    %p278 = por %p276, %p277
    %p279 = scmp.ne.s32.totalorder %s268, %s271
    %p280 = scmp.eq.s32.totalorder %s27, 3
    %p281 = por %p279, %p280
    %p282 = scmp.ne.s32.totalorder %s271, %s272
    %p283 = scmp.eq.s32.totalorder %s27, 0
    %p284 = por %p282, %p283
    %p285 = scmp.ne.s32.totalorder %s271, %s272
    %p286 = scmp.eq.s32.totalorder %s28, 3
    %p287 = por %p285, %p286
    %p289 = scmp.ne.s32.totalorder %s272, %s288
    %p290 = scmp.eq.s32.totalorder %s28, 0
    %p291 = por %p289, %p290
    %s292 = ssub.s32 %s30, %s37
    %p293 = scmp.eq.s32.totalorder %s292, 0
    %s295 = sadd.s32 %s294, 1
    %s296 = scalar_select %p293, %s294, %s295
    %p299 = pneg %p293
    %p300 = scmp.eq.s32.totalorder %s22, 3
    %p301 = por %p299, %p300
    %p302 = scmp.ne.s32.totalorder %s294, %s297
    %p303 = scmp.eq.s32.totalorder %s22, 0
    %p304 = por %p302, %p303
    %p305 = scmp.ne.s32.totalorder %s294, %s297
    %p306 = scmp.eq.s32.totalorder %s27, 3
    %p307 = por %p305, %p306
    %p308 = scmp.ne.s32.totalorder %s297, %s298
    %p309 = scmp.eq.s32.totalorder %s27, 0
    %p310 = por %p308, %p309
    %p311 = scmp.ne.s32.totalorder %s297, %s298
    %p312 = scmp.eq.s32.totalorder %s28, 3
    %p313 = por %p311, %p312
    %p315 = scmp.ne.s32.totalorder %s298, %s314
    %p316 = scmp.eq.s32.totalorder %s28, 0
    %p317 = por %p315, %p316
    %s318 = ssub.s32 %s30, %s37
    %p319 = scmp.eq.s32.totalorder %s318, 0
    %s321 = sadd.s32 %s320, 1
    %s322 = scalar_select %p319, %s320, %s321
    %p325 = pneg %p319
    %p326 = scmp.eq.s32.totalorder %s22, 3
    %p327 = por %p325, %p326
    %p328 = scmp.ne.s32.totalorder %s320, %s323
    %p329 = scmp.eq.s32.totalorder %s22, 0
    %p330 = por %p328, %p329
    %p331 = scmp.ne.s32.totalorder %s320, %s323
    %p332 = scmp.eq.s32.totalorder %s27, 3
    %p333 = por %p331, %p332
    %p334 = scmp.ne.s32.totalorder %s323, %s324
    %p335 = scmp.eq.s32.totalorder %s27, 0
    %p336 = por %p334, %p335
    %p337 = scmp.ne.s32.totalorder %s323, %s324
    %p338 = scmp.eq.s32.totalorder %s28, 3
    %p339 = por %p337, %p338
    %p341 = scmp.ne.s32.totalorder %s324, %s340
    %p342 = scmp.eq.s32.totalorder %s28, 0
    %p343 = por %p341, %p342
    %s344 = ssub.s32 %s30, %s37
    %p345 = scmp.eq.s32.totalorder %s344, 0
    %s347 = sadd.s32 %s346, 1
    %s348 = scalar_select %p345, %s346, %s347
    %p351 = pneg %p345
    %p352 = scmp.eq.s32.totalorder %s22, 3
    %p353 = por %p351, %p352
    %p354 = scmp.ne.s32.totalorder %s346, %s349
    %p355 = scmp.eq.s32.totalorder %s22, 0
    %p356 = por %p354, %p355
    %p357 = scmp.ne.s32.totalorder %s346, %s349
    %p358 = scmp.eq.s32.totalorder %s27, 3
    %p359 = por %p357, %p358
    %p360 = scmp.ne.s32.totalorder %s349, %s350
    %p361 = scmp.eq.s32.totalorder %s27, 0
    %p362 = por %p360, %p361
    %p363 = scmp.ne.s32.totalorder %s349, %s350
    %p364 = scmp.eq.s32.totalorder %s28, 3
    %p365 = por %p363, %p364
    %p367 = scmp.ne.s32.totalorder %s350, %s366
    %p368 = scmp.eq.s32.totalorder %s28, 0
    %p369 = por %p367, %p368
    %s370 = ssub.s32 %s30, %s37
    %p371 = scmp.eq.s32.totalorder %s370, 0
    %s373 = sadd.s32 %s372, 1
    %s374 = scalar_select %p371, %s372, %s373
    %p377 = pneg %p371
    %p378 = scmp.eq.s32.totalorder %s22, 3
    %p379 = por %p377, %p378
    %p380 = scmp.ne.s32.totalorder %s372, %s375
    %p381 = scmp.eq.s32.totalorder %s22, 0
    %p382 = por %p380, %p381
    %p383 = scmp.ne.s32.totalorder %s372, %s375
    %p384 = scmp.eq.s32.totalorder %s27, 3
    %p385 = por %p383, %p384
    %p386 = scmp.ne.s32.totalorder %s375, %s376
    %p387 = scmp.eq.s32.totalorder %s27, 0
    %p388 = por %p386, %p387
    %p389 = scmp.ne.s32.totalorder %s375, %s376
    %p390 = scmp.eq.s32.totalorder %s28, 3
    %p391 = por %p389, %p390
    %p393 = scmp.ne.s32.totalorder %s376, %s392
    %p394 = scmp.eq.s32.totalorder %s28, 0
    %p395 = por %p393, %p394
    %s396 = ssub.s32 %s30, %s37
    %p397 = scmp.eq.s32.totalorder %s396, 0
    %s399 = sadd.s32 %s398, 1
    %s400 = scalar_select %p397, %s398, %s399
    %p403 = pneg %p397
    %p404 = scmp.eq.s32.totalorder %s22, 3
    %p405 = por %p403, %p404
    %p406 = scmp.ne.s32.totalorder %s398, %s401
    %p407 = scmp.eq.s32.totalorder %s22, 0
    %p408 = por %p406, %p407
    %p409 = scmp.ne.s32.totalorder %s398, %s401
    %p410 = scmp.eq.s32.totalorder %s27, 3
    %p411 = por %p409, %p410
    %p412 = scmp.ne.s32.totalorder %s401, %s402
    %p413 = scmp.eq.s32.totalorder %s27, 0
    %p414 = por %p412, %p413
    %p415 = scmp.ne.s32.totalorder %s401, %s402
    %p416 = scmp.eq.s32.totalorder %s28, 3
    %p417 = por %p415, %p416
    %p419 = scmp.ne.s32.totalorder %s402, %s418
    %p420 = scmp.eq.s32.totalorder %s28, 0
    %p421 = por %p419, %p420
    %s422 = ssub.s32 %s29, %s41
    %p423 = scmp.eq.s32.totalorder %s422, 0
    %s425 = sadd.s32 %s424, 1
    %s426 = scalar_select %p423, %s424, %s425
    %p429 = pneg %p423
    %p430 = scmp.eq.s32.totalorder %s22, 3
    %p431 = por %p429, %p430
    %p432 = scmp.ne.s32.totalorder %s424, %s427
    %p433 = scmp.eq.s32.totalorder %s22, 0
    %p434 = por %p432, %p433
    %p435 = scmp.ne.s32.totalorder %s424, %s427
    %p436 = scmp.eq.s32.totalorder %s27, 3
    %p437 = por %p435, %p436
    %p438 = scmp.ne.s32.totalorder %s427, %s428
    %p439 = scmp.eq.s32.totalorder %s27, 0
    %p440 = por %p438, %p439
    %p441 = scmp.ne.s32.totalorder %s427, %s428
    %p442 = scmp.eq.s32.totalorder %s28, 3
    %p443 = por %p441, %p442
    %p445 = scmp.ne.s32.totalorder %s428, %s444
    %p446 = scmp.eq.s32.totalorder %s28, 0
    %p447 = por %p445, %p446
    %p448 = scmp.le.s32.totalorder 1, %s22
    %p449 = scmp.lt.s32.totalorder %s22, 5
    %p450 = pnand %p448, %p449
    %p451 = pneg %p450
    // Predicated region
    $region9: #{deberta_classifier_forward.1} parent=5 // pred_check
      _
    $region10: #{deberta_classifier_forward.1} parent=5 // pred_check_branch
      %453 = sbr.rel (%p450) target = $region12
    $region11: #{deberta_classifier_forward.1} parent=5 // pred_region
      %s454 = ssub.s32 %s22, 1
      // Predicated region
      $region13: #{deberta_classifier_forward.1} parent=11 // pred_check
        %p455 = pneg %p81
      $region14: #{deberta_classifier_forward.1} parent=11 // pred_check_branch
        %457 = sbr.rel (%p455) target = $region16
      $region15: #{deberta_classifier_forward.1} parent=11 // pred_region
        _
      $region16: #{deberta_classifier_forward.1} parent=11 // pred_fallthru
        _
      // Predicated region
      $region17: #{deberta_classifier_forward.1} parent=11 // pred_check
        %p458 = pneg %p102
      $region18: #{deberta_classifier_forward.1} parent=11 // pred_check_branch
        %460 = sbr.rel (%p458) target = $region20
      $region19: #{deberta_classifier_forward.1} parent=11 // pred_region
        _
      $region20: #{deberta_classifier_forward.1} parent=11 // pred_fallthru
        _
    $region12: #{deberta_classifier_forward.1} parent=5 // pred_fallthru
      _
    %p461 = scmp.lt.s32.totalorder %s22, 4
    // Predicated region
    $region21: #{deberta_classifier_forward.1} parent=5 // pred_check
      %p462 = pneg %p461
    $region22: #{deberta_classifier_forward.1} parent=5 // pred_check_branch
      %464 = sbr.rel (%p462) target = $region24
    $region23: #{deberta_classifier_forward.1} parent=5 // pred_region
      // Predicated region
      $region25: #{deberta_classifier_forward.1} parent=23 // pred_check
        %p465 = pneg %p54
      $region26: #{deberta_classifier_forward.1} parent=23 // pred_check_branch
        %467 = sbr.rel (%p465) target = $region28
      $region27: #{deberta_classifier_forward.1} parent=23 // pred_region
        %p468 = scmp.lt.s32.totalorder %s29, 1
        %s469 = scalar_select %p468, %s29, 1
        %s470 = scalar_lea.vmem %s1, %s469
      $region28: #{deberta_classifier_forward.1} parent=23 // pred_fallthru
        _
      // Predicated region
      $region29: #{deberta_classifier_forward.1} parent=23 // pred_check
        %p471 = pneg %p122
      $region30: #{deberta_classifier_forward.1} parent=23 // pred_check_branch
        %473 = sbr.rel (%p471) target = $region32
      $region31: #{deberta_classifier_forward.1} parent=23 // pred_region
        %p474 = scmp.lt.s32.totalorder %s30, 1
        %s475 = scalar_select %p474, %s30, 1
        %s476 = smul.addr %s475, 16
        %s477 = smul.addr %s476, 4
        %s478 = scalar_lea.vmem %s4, %s477
      $region32: #{deberta_classifier_forward.1} parent=23 // pred_fallthru
        _
      // Predicated region
      $region33: #{deberta_classifier_forward.1} parent=23 // pred_check
        %p479 = pneg %p148
      $region34: #{deberta_classifier_forward.1} parent=23 // pred_check_branch
        %481 = sbr.rel (%p479) target = $region36
      $region35: #{deberta_classifier_forward.1} parent=23 // pred_region
        %p482 = scmp.lt.s32.totalorder %s30, 1
        %s483 = scalar_select %p482, %s30, 1
        %s484 = smul.addr %s483, 2
        %s485 = scalar_lea.vmem %s5, %s484
      $region36: #{deberta_classifier_forward.1} parent=23 // pred_fallthru
        _
      // Predicated region
      $region37: #{deberta_classifier_forward.1} parent=23 // pred_check
        %p486 = pneg %p174
      $region38: #{deberta_classifier_forward.1} parent=23 // pred_check_branch
        %488 = sbr.rel (%p486) target = $region40
      $region39: #{deberta_classifier_forward.1} parent=23 // pred_region
        %p489 = scmp.lt.s32.totalorder %s30, 1
        %s490 = scalar_select %p489, %s30, 1
        %s491 = smul.addr %s490, 8
        %s492 = smul.addr %s491, 4
        %s493 = scalar_lea.vmem %s6, %s492
      $region40: #{deberta_classifier_forward.1} parent=23 // pred_fallthru
        _
      // Predicated region
      $region41: #{deberta_classifier_forward.1} parent=23 // pred_check
        %p494 = pneg %p200
      $region42: #{deberta_classifier_forward.1} parent=23 // pred_check_branch
        %496 = sbr.rel (%p494) target = $region44
      $region43: #{deberta_classifier_forward.1} parent=23 // pred_region
        %p497 = scmp.lt.s32.totalorder %s30, 1
        %s498 = scalar_select %p497, %s30, 1
        %s499 = scalar_lea.vmem %s7, %s498
      $region44: #{deberta_classifier_forward.1} parent=23 // pred_fallthru
        _
      // Predicated region
      $region45: #{deberta_classifier_forward.1} parent=23 // pred_check
        %p500 = pneg %p226
      $region46: #{deberta_classifier_forward.1} parent=23 // pred_check_branch
        %502 = sbr.rel (%p500) target = $region48
      $region47: #{deberta_classifier_forward.1} parent=23 // pred_region
        %p503 = scmp.lt.s32.totalorder %s30, 1
        %s504 = scalar_select %p503, %s30, 1
        %s505 = scalar_lea.vmem %s8, %s504
      $region48: #{deberta_classifier_forward.1} parent=23 // pred_fallthru
        _
      // Predicated region
      $region49: #{deberta_classifier_forward.1} parent=23 // pred_check
        %p506 = pneg %p252
      $region50: #{deberta_classifier_forward.1} parent=23 // pred_check_branch
        %508 = sbr.rel (%p506) target = $region52
      $region51: #{deberta_classifier_forward.1} parent=23 // pred_region
        %p509 = scmp.lt.s32.totalorder %s30, 1
        %s510 = scalar_select %p509, %s30, 1
        %s511 = scalar_lea.vmem %s9, %s510
      $region52: #{deberta_classifier_forward.1} parent=23 // pred_fallthru
        _
      // Predicated region
      $region53: #{deberta_classifier_forward.1} parent=23 // pred_check
        %p512 = pneg %p278
      $region54: #{deberta_classifier_forward.1} parent=23 // pred_check_branch
        %514 = sbr.rel (%p512) target = $region56
      $region55: #{deberta_classifier_forward.1} parent=23 // pred_region
        %p515 = scmp.lt.s32.totalorder %s30, 1
        %s516 = scalar_select %p515, %s30, 1
        %s517 = smul.addr %s516, 8
        %s518 = smul.addr %s517, 4
        %s519 = scalar_lea.vmem %s10, %s518
      $region56: #{deberta_classifier_forward.1} parent=23 // pred_fallthru
        _
      // Predicated region
      $region57: #{deberta_classifier_forward.1} parent=23 // pred_check
        %p520 = pneg %p304
      $region58: #{deberta_classifier_forward.1} parent=23 // pred_check_branch
        %522 = sbr.rel (%p520) target = $region60
      $region59: #{deberta_classifier_forward.1} parent=23 // pred_region
        %p523 = scmp.lt.s32.totalorder %s30, 1
        %s524 = scalar_select %p523, %s30, 1
        %s525 = scalar_lea.vmem %s11, %s524
      $region60: #{deberta_classifier_forward.1} parent=23 // pred_fallthru
        _
      // Predicated region
      $region61: #{deberta_classifier_forward.1} parent=23 // pred_check
        %p526 = pneg %p330
      $region62: #{deberta_classifier_forward.1} parent=23 // pred_check_branch
        %528 = sbr.rel (%p526) target = $region64
      $region63: #{deberta_classifier_forward.1} parent=23 // pred_region
        %p529 = scmp.lt.s32.totalorder %s30, 1
        %s530 = scalar_select %p529, %s30, 1
        %s531 = smul.addr %s530, 16
        %s532 = smul.addr %s531, 4
        %s533 = scalar_lea.vmem %s12, %s532
      $region64: #{deberta_classifier_forward.1} parent=23 // pred_fallthru
        _
      // Predicated region
      $region65: #{deberta_classifier_forward.1} parent=23 // pred_check
        %p534 = pneg %p356
      $region66: #{deberta_classifier_forward.1} parent=23 // pred_check_branch
        %536 = sbr.rel (%p534) target = $region68
      $region67: #{deberta_classifier_forward.1} parent=23 // pred_region
        %p537 = scmp.lt.s32.totalorder %s30, 1
        %s538 = scalar_select %p537, %s30, 1
        %s539 = scalar_lea.vmem %s13, %s538
      $region68: #{deberta_classifier_forward.1} parent=23 // pred_fallthru
        _
      // Predicated region
      $region69: #{deberta_classifier_forward.1} parent=23 // pred_check
        %p540 = pneg %p382
      $region70: #{deberta_classifier_forward.1} parent=23 // pred_check_branch
        %542 = sbr.rel (%p540) target = $region72
      $region71: #{deberta_classifier_forward.1} parent=23 // pred_region
        %p543 = scmp.lt.s32.totalorder %s30, 1
        %s544 = scalar_select %p543, %s30, 1
        %s545 = scalar_lea.vmem %s14, %s544
      $region72: #{deberta_classifier_forward.1} parent=23 // pred_fallthru
        _
      // Predicated region
      $region73: #{deberta_classifier_forward.1} parent=23 // pred_check
        %p546 = pneg %p408
      $region74: #{deberta_classifier_forward.1} parent=23 // pred_check_branch
        %548 = sbr.rel (%p546) target = $region76
      $region75: #{deberta_classifier_forward.1} parent=23 // pred_region
        %p549 = scmp.lt.s32.totalorder %s30, 1
        %s550 = scalar_select %p549, %s30, 1
        %s551 = scalar_lea.vmem %s15, %s550
      $region76: #{deberta_classifier_forward.1} parent=23 // pred_fallthru
        _
    $region24: #{deberta_classifier_forward.1} parent=5 // pred_fallthru
      _
    %p552 = scmp.le.s32.totalorder 1, %s22
    %p553 = scmp.lt.s32.totalorder %s22, 5
    %p554 = pnand %p552, %p553
    %p555 = pneg %p554
    // Predicated region
    $region77: #{deberta_classifier_forward.1} parent=5 // pred_check
      _
    $region78: #{deberta_classifier_forward.1} parent=5 // pred_check_branch
      %557 = sbr.rel (%p554) target = $region80
    $region79: #{deberta_classifier_forward.1} parent=5 // pred_region
      %s558 = ssub.s32 %s22, 1
      %p559 = scmp.lt.s32.totalorder %s31, 1
      %s560 = scalar_select %p559, %s31, 1
      %s561 = scalar_lea.vmem %s1, %s560
      %p562 = pneg %p60
      %p563 = pneg %p57
      %p564 = pneg %p81
      %p565 = pneg %p78
      %p566 = pneg %p102
      %p567 = pneg %p99
      %p568 = scmp.lt.s32.totalorder %s32, 1
      %s569 = scalar_select %p568, %s32, 1
      %s570 = smul.addr %s569, 16
      %s571 = smul.addr %s570, 4
      %s572 = scalar_lea.vmem %s4, %s571
      %p573 = pneg %p128
      %p574 = pneg %p125
      %p575 = scmp.lt.s32.totalorder %s32, 1
      %s576 = scalar_select %p575, %s32, 1
      %s577 = smul.addr %s576, 2
      %s578 = scalar_lea.vmem %s5, %s577
      %p579 = pneg %p154
      %p580 = pneg %p151
      %p581 = scmp.lt.s32.totalorder %s32, 1
      %s582 = scalar_select %p581, %s32, 1
      %s583 = smul.addr %s582, 8
      %s584 = smul.addr %s583, 4
      %s585 = scalar_lea.vmem %s6, %s584
      %p586 = pneg %p180
      %p587 = pneg %p177
      %p588 = scmp.lt.s32.totalorder %s32, 1
      %s589 = scalar_select %p588, %s32, 1
      %s590 = scalar_lea.vmem %s7, %s589
      %p591 = pneg %p206
      %p592 = pneg %p203
      %p593 = scmp.lt.s32.totalorder %s32, 1
      %s594 = scalar_select %p593, %s32, 1
      %s595 = scalar_lea.vmem %s8, %s594
      %p596 = pneg %p232
      %p597 = pneg %p229
      %p598 = scmp.lt.s32.totalorder %s32, 1
      %s599 = scalar_select %p598, %s32, 1
      %s600 = scalar_lea.vmem %s9, %s599
      %p601 = pneg %p258
      %p602 = pneg %p255
      %p603 = scmp.lt.s32.totalorder %s32, 1
      %s604 = scalar_select %p603, %s32, 1
      %s605 = smul.addr %s604, 8
      %s606 = smul.addr %s605, 4
      %s607 = scalar_lea.vmem %s10, %s606
      %p608 = pneg %p284
      %p609 = pneg %p281
      %p610 = scmp.lt.s32.totalorder %s32, 1
      %s611 = scalar_select %p610, %s32, 1
      %s612 = scalar_lea.vmem %s11, %s611
      %p613 = pneg %p310
      %p614 = pneg %p307
      %p615 = scmp.lt.s32.totalorder %s32, 1
      %s616 = scalar_select %p615, %s32, 1
      %s617 = smul.addr %s616, 16
      %s618 = smul.addr %s617, 4
      %s619 = scalar_lea.vmem %s12, %s618
      %p620 = pneg %p336
      %p621 = pneg %p333
      %p622 = scmp.lt.s32.totalorder %s32, 1
      %s623 = scalar_select %p622, %s32, 1
      %s624 = scalar_lea.vmem %s13, %s623
      %p625 = pneg %p362
      %p626 = pneg %p359
      %p627 = scmp.lt.s32.totalorder %s32, 1
      %s628 = scalar_select %p627, %s32, 1
      %s629 = scalar_lea.vmem %s14, %s628
      %p630 = pneg %p388
      %p631 = pneg %p385
      %p632 = scmp.lt.s32.totalorder %s32, 1
      %s633 = scalar_select %p632, %s32, 1
      %s634 = scalar_lea.vmem %s15, %s633
      %p635 = pneg %p414
      %p636 = pneg %p411
      %p637 = pneg %p440
      %p638 = pneg %p437
      %s639 = smul.u32 2, %s31
      %p640 = scmp.lt.s32.totalorder %s639, 3
      %s641 = scalar_select %p640, %s639, 3
      %s642 = smul.addr %s641, 8
      %s643 = scalar_lea.vmem %s16, %s642
      %p644 = scmp.lt.s32.totalorder %s31, 1
      %s645 = scalar_select %p644, %s31, 1
      %s646 = scalar_lea.vmem %s1, %s645
      %p647 = scmp.lt.s32.totalorder %s32, 1
      %s648 = scalar_select %p647, %s32, 1
      %s649 = smul.addr %s648, 16
      %s650 = smul.addr %s649, 4
      %s651 = scalar_lea.vmem %s4, %s650
      %p652 = scmp.lt.s32.totalorder %s32, 1
      %s653 = scalar_select %p652, %s32, 1
      %s654 = smul.addr %s653, 2
      %s655 = scalar_lea.vmem %s5, %s654
      %p656 = scmp.lt.s32.totalorder %s32, 1
      %s657 = scalar_select %p656, %s32, 1
      %s658 = smul.addr %s657, 8
      %s659 = smul.addr %s658, 4
      %s660 = scalar_lea.vmem %s6, %s659
      %p661 = scmp.lt.s32.totalorder %s32, 1
      %s662 = scalar_select %p661, %s32, 1
      %s663 = scalar_lea.vmem %s7, %s662
      %p664 = scmp.lt.s32.totalorder %s32, 1
      %s665 = scalar_select %p664, %s32, 1
      %s666 = scalar_lea.vmem %s8, %s665
      %p667 = scmp.lt.s32.totalorder %s32, 1
      %s668 = scalar_select %p667, %s32, 1
      %s669 = scalar_lea.vmem %s9, %s668
      %p670 = scmp.lt.s32.totalorder %s32, 1
      %s671 = scalar_select %p670, %s32, 1
      %s672 = smul.addr %s671, 8
      %s673 = smul.addr %s672, 4
      %s674 = scalar_lea.vmem %s10, %s673
      %p675 = scmp.lt.s32.totalorder %s32, 1
      %s676 = scalar_select %p675, %s32, 1
      %s677 = scalar_lea.vmem %s11, %s676
      %p678 = scmp.lt.s32.totalorder %s32, 1
      %s679 = scalar_select %p678, %s32, 1
      %s680 = smul.addr %s679, 16
      %s681 = smul.addr %s680, 4
      %s682 = scalar_lea.vmem %s12, %s681
      %p683 = scmp.lt.s32.totalorder %s32, 1
      %s684 = scalar_select %p683, %s32, 1
      %s685 = scalar_lea.vmem %s13, %s684
      %p686 = scmp.lt.s32.totalorder %s32, 1
      %s687 = scalar_select %p686, %s32, 1
      %s688 = scalar_lea.vmem %s14, %s687
      %p689 = scmp.lt.s32.totalorder %s32, 1
      %s690 = scalar_select %p689, %s32, 1
      %s691 = scalar_lea.vmem %s15, %s690
      %s692 = smul.u32 2, %s31
      %p693 = scmp.lt.s32.totalorder %s692, 3
      %s694 = scalar_select %p693, %s692, 3
      %s695 = smul.addr %s694, 8
      %s696 = scalar_lea.vmem %s16, %s695
      %s697 = smul.u32 2, %s31
      %p699 = scmp.eq.s32.totalorder %s32, 0
      // Predicated region
      $region81: #{deberta_classifier_forward.1} parent=79 // pred_check
        %p700 = pneg %p699
      $region82: #{deberta_classifier_forward.1} parent=79 // pred_check_branch
        %702 = sbr.rel (%p700) target = $region84
      $region83: #{deberta_classifier_forward.1} parent=79 // pred_region
        %s703 = smul.u32 %s31, 16
        %s704 = scalar_lea.vmem %s0, %s703
        %p706 = scmp.lt.u32.totalorder 16, 8
        %p707 = pneg %p706
        // Predicated region
        $region85: #{deberta_classifier_forward.1} parent=83 // pred_check
          _
        $region86: #{deberta_classifier_forward.1} parent=83 // pred_check_branch
          %709 = sbr.rel (%p706) target = $region88
        $region87: #{deberta_classifier_forward.1} parent=83 // pred_region
          %s724 = sand.u32 16, 7
          %p725 = scmp.eq.s32.totalorder %s724, 0
          // Predicated region
          $region100: #{deberta_classifier_forward.1} parent=87 // pred_check
            %p726 = pneg %p725
          $region101: #{deberta_classifier_forward.1} parent=87 // pred_check_branch
            %728 = sbr.rel (%p726) target = $region103
          $region102: #{deberta_classifier_forward.1} parent=87 // pred_region
            loop: start=0, step=1, limit=1
            $region104: #{deberta_classifier_forward.1} parent=102 // loop_pre_header
              _
            $region105: #{deberta_classifier_forward.1} parent=102 // loop_header
              %s730 = sphi 0, %s734
              %p731 = scmp.ge.s32.totalorder %s730, 1
              %s735 = sphi %s704, %s704
              %s736 = sphi [#allocation2], [#allocation2]
            $region106: #{deberta_classifier_forward.1} parent=102 // loop_header_branch
              %733 = sbr.rel (%p731) target = $region110
            $region107: #{deberta_classifier_forward.1} parent=102 // loop_body
              %v737 = vld [vmem:[%s735] sm:$0xff]
              %738 = vst [vmem:[%s736] sm:$0xff] %v737
              %v739 = vld [vmem:[%s735 + $0x8] sm:$0xff]
              %740 = vst [vmem:[%s736 + $0x8] sm:$0xff] %v739
            $region108: #{deberta_classifier_forward.1} parent=102 // loop_footer
              %s734 = sadd.s32 1, %s730
            $region109: #{deberta_classifier_forward.1} parent=102 // loop_footer_branch
              %729 = sbr.rel target = $region105
            $region110: #{deberta_classifier_forward.1} parent=102 // loop_exit
              _
          $region103: #{deberta_classifier_forward.1} parent=87 // pred_fallthru
            _
          %p741 = pneg %p725
          // Predicated region
          $region111: #{deberta_classifier_forward.1} parent=87 // pred_check
            _
          $region112: #{deberta_classifier_forward.1} parent=87 // pred_check_branch
            %743 = sbr.rel (%p725) target = $region114
          $region113: #{deberta_classifier_forward.1} parent=87 // pred_region
            %s744 = sand.u32 16, 7
          $region114: #{deberta_classifier_forward.1} parent=87 // pred_fallthru
            _
        $region88: #{deberta_classifier_forward.1} parent=83 // pred_fallthru
          _
        // Predicated region
        $region89: #{deberta_classifier_forward.1} parent=83 // pred_check
          %p710 = pneg %p706
        $region90: #{deberta_classifier_forward.1} parent=83 // pred_check_branch
          %712 = sbr.rel (%p710) target = $region92
        $region91: #{deberta_classifier_forward.1} parent=83 // pred_region
          %s713 = sshllo.u32 0, 16
          loop: start=0, step=1, limit=1
          $region93: #{deberta_classifier_forward.1} parent=91 // loop_pre_header
            _
          $region94: #{deberta_classifier_forward.1} parent=91 // loop_header
            %s715 = sphi 0, %s719
            %p716 = scmp.ge.s32.totalorder %s715, 1
            %s720 = sphi %s704, %s704
            %s721 = sphi [#allocation2], [#allocation2]
          $region95: #{deberta_classifier_forward.1} parent=91 // loop_header_branch
            %718 = sbr.rel (%p716) target = $region99
          $region96: #{deberta_classifier_forward.1} parent=91 // loop_body
            %v722 = vld [vmem:[%s720] sm:%s713]
            %723 = vst [vmem:[%s721] sm:%s713] %v722
          $region97: #{deberta_classifier_forward.1} parent=91 // loop_footer
            %s719 = sadd.s32 1, %s715
          $region98: #{deberta_classifier_forward.1} parent=91 // loop_footer_branch
            %714 = sbr.rel target = $region94
          $region99: #{deberta_classifier_forward.1} parent=91 // loop_exit
            _
        $region92: #{deberta_classifier_forward.1} parent=83 // pred_fallthru
          _
        // Predicated region
        $region115: #{deberta_classifier_forward.1} parent=83 // pred_check
          _
        $region116: #{deberta_classifier_forward.1} parent=83 // pred_check_branch
          %747 = sbr.rel (0) target = $region118
        $region117: #{deberta_classifier_forward.1} parent=83 // pred_region
          %748 = vsyncadd [#allocation4], 256
        $region118: #{deberta_classifier_forward.1} parent=83 // pred_fallthru
          _
        %s749 = smul.u32 16, 1
        %s750 = sshll.u32 %s749, 4
        %751 = dma.done [#allocation4], %s750
        %v752 = vld [vmem:[#allocation2] sm:$0xff]
        %v753 = vld [vmem:[#allocation2 + $0x8] sm:$0xff]
        %v754 = vld [vmem:[%s2] sm:$0x1]
        %v755 = vld [vmem:[%s3] sm:$0x1]
        %vm756 = vcmask 523264
        %v757 = vsel %vm756, %v752, 0.0
        %758 = vadd.xlane.f32.xlu0 %v757
        %v759 = vpop.xlane.xlu0 %758
        %v760 = vsel %vm756, %v753, 0.0
        %761 = vadd.xlane.f32.xlu0 %v760
        %v762 = vpop.xlane.xlu0 %761
        %v763 = vrcp.pop 64.0
        %v764 = vmul.f32 %v759, %v763
        %v765 = vmul.f32 %v762, %v763
        %v766 = vsub.f32 %v752, %v764
        %v767 = vsub.f32 %v753, %v765
        %v768 = vmul.f32 %v766, %v766
        %v769 = vmul.f32 %v767, %v767
        %v770 = vsel %vm756, %v768, 0.0
        %771 = vadd.xlane.f32.xlu0 %v770
        %v772 = vpop.xlane.xlu0 %771
        %v773 = vsel %vm756, %v769, 0.0
        %774 = vadd.xlane.f32.xlu0 %v773
        %v775 = vpop.xlane.xlu0 %774
        %v776 = vmul.f32 %v772, %v763
        %v777 = vmul.f32 %v775, %v763
        %v778 = vadd.f32 %v776, 1e-07
        %v779 = vadd.f32 %v777, 1e-07
        %v780 = vrsqrt.pop %v778
        %v781 = vrsqrt.pop %v779
        %v782 = vmul.f32 %v766, %v780
        %v783 = vmul.f32 %v767, %v781
        %v785 = vlaneseq
        %v786 = vshrl.u32 %v785, 7
        %v787 = vsub.s32 0, %v786
        %v788 = vrot.slane %v754, %v787
        %v790 = vmul.f32 %v782, %v788
        %v791 = vmul.f32 %v783, %v788
        %v793 = vlaneseq
        %v794 = vshrl.u32 %v793, 7
        %v795 = vsub.s32 0, %v794
        %v796 = vrot.slane %v755, %v795
        %v798 = vadd.f32 %v790, %v796
        %v799 = vadd.f32 %v791, %v796
        %800 = vst.msk [vmem:[#allocation2] sm:$0xff] %vm756, %v798
        %801 = vst.msk [vmem:[#allocation2 + $0x8] sm:$0xff] %vm756, %v799
      $region84: #{deberta_classifier_forward.1} parent=79 // pred_fallthru
        _
      %v802 = vld [vmem:[#allocation2] sm:$0xff]
      %v803 = vld [vmem:[#allocation2 + $0x8] sm:$0xff]
      %v804 = vpack.c.bf16 %v803, %v802
      %v805 = vld [vmem:[%s651] sm:$0xff]
      %v806 = vld [vmem:[%s651 + $0x8] sm:$0xff]
      %v807 = vld [vmem:[%s651 + $0x10] sm:$0xff]
      %v808 = vld [vmem:[%s651 + $0x18] sm:$0xff]
      %v809 = vld [vmem:[%s651 + $0x20] sm:$0xff]
      %v810 = vld [vmem:[%s651 + $0x28] sm:$0xff]
      %v811 = vld [vmem:[%s651 + $0x30] sm:$0xff]
      %v812 = vld [vmem:[%s651 + $0x38] sm:$0xff]
      %v813 = vld [vmem:[%s655] sm:$0x3]
      %v815 = vlaneseq
      %v816 = vshrl.u32 %v815, 7
      %v817 = vsub.s32 0, %v816
      %v818 = vrot.slane %v813, %v817
      %v819 = vlaneseq
      %v820 = vshrl.u32 %v819, 7
      %v821 = vsub.s32 1, %v820
      %v822 = vrot.slane %v813, %v821
      %v833 = vunpack.c.l.b16 %v805
      %v834 = vunpack.c.h.b16 %v805
      %v835 = vunpack.c.l.b16 %v806
      %v836 = vunpack.c.h.b16 %v806
      %v837 = vunpack.c.l.b16 %v807
      %v838 = vunpack.c.h.b16 %v807
      %v839 = vunpack.c.l.b16 %v808
      %v840 = vunpack.c.h.b16 %v808
      %v841 = vunpack.c.l.b16 %v809
      %v842 = vunpack.c.h.b16 %v809
      %v843 = vunpack.c.l.b16 %v810
      %v844 = vunpack.c.h.b16 %v810
      %v845 = vunpack.c.l.b16 %v811
      %v846 = vunpack.c.h.b16 %v811
      %v847 = vunpack.c.l.b16 %v812
      %v848 = vunpack.c.h.b16 %v812
      %v849 = vpack.c.b16 %v835, %v833
      %v850 = vpack.c.b16 %v836, %v834
      %v851 = vpack.c.b16 %v839, %v837
      %v852 = vpack.c.b16 %v840, %v838
      %v853 = vpack.c.b16 %v843, %v841
      %v854 = vpack.c.b16 %v844, %v842
      %v855 = vpack.c.b16 %v847, %v845
      %v856 = vpack.c.b16 %v848, %v846
      %vm865 = vcmask 523264
      %v867 = vsel %vm865, %v804, 0
      %869 = vmatprep.subr.bf16.mxu0 %v850
      %870 = vmatpush1.bf16.msra.mxu0 %v849
      %871 = vmatprep.subr.bf16.mxu0 %v852
      %872 = vmatpush1.bf16.msra.mxu0 %v851
      %873 = vmatprep.subr.bf16.mxu0 %v854
      %874 = vmatpush1.bf16.msra.mxu0 %v853
      %875 = vmatprep.subr.bf16.mxu0 %v856
      %876 = vmatpush1.bf16.msra.mxu0 %v855
      %877 = vmatprep.subr.bf16.mxu0 0
      %878 = vmatpush1.bf16.msra.mxu0 0
      %879 = vmatprep.subr.bf16.mxu0 0
      %880 = vmatpush1.bf16.msra.mxu0 0
      %881 = vmatprep.subr.bf16.mxu0 0
      %882 = vmatpush1.bf16.msra.mxu0 0
      %883 = vmatprep.subr.bf16.mxu0 0
      %884 = vmatpush1.bf16.msra.mxu0 0
      %885 = vmatprep.subr.bf16.mxu0 0
      %886 = vmatpush1.bf16.msra.mxu0 0
      %887 = vmatprep.subr.bf16.mxu0 0
      %888 = vmatpush1.bf16.msra.mxu0 0
      %889 = vmatprep.subr.bf16.mxu0 0
      %890 = vmatpush1.bf16.msra.mxu0 0
      %891 = vmatprep.subr.bf16.mxu0 0
      %892 = vmatpush1.bf16.msra.mxu0 0
      %893 = vmatprep.subr.bf16.mxu0 0
      %894 = vmatpush1.bf16.msra.mxu0 0
      %895 = vmatprep.subr.bf16.mxu0 0
      %896 = vmatpush1.bf16.msra.mxu0 0
      %897 = vmatprep.subr.bf16.mxu0 0
      %898 = vmatpush1.bf16.msra.mxu0 0
      %899 = vmatprep.subr.bf16.mxu0 0
      %900 = vmatpush1.bf16.msra.mxu0 0
      %901 = vmatprep.mubr.bf16.mxu0 0
      %902 = vmatmul.mubr.bf16.gmra.mrb[0].mxu0 %v867
      %v903 = vpop.f32.mrb[0].mxu0
      %v904 = vadd.f32 %v818, %v903
      %v905 = vpop.f32.mrb[0].mxu0
      %v906 = vadd.f32 %v822, %v905
      %v907 = vpop.f32.mrb[0].mxu0
      %v908 = vadd.f32 %v818, %v907
      %v909 = vpop.f32.mrb[0].mxu0
      %v910 = vadd.f32 %v822, %v909
      %911 = vdwg.mxu0
      %v912 = vld [vmem:[%s646] sm:$0x1]
      %v913 = vmul.f32 %v904, 0.25
      %v914 = vmul.f32 %v908, 0.25
      %v915 = vpack.c.bf16 %v914, %v913
      %v916 = vpack.c.bf16 %v908, %v904
      %v918 = vlaneseq
      %v919 = vshrl.u32 %v918, 7
      %v920 = vsub.s32 0, %v919
      %v921 = vrot.slane %v912, %v920
      %924 = vrot.lane.b32.xlu0 %v916, 64
      %v925 = vpop.permute.xlu0 %924
      %vm926 = vcmask 130048
      %v928 = vsel %vm926, %v915, 0
      %v931 = vsel %vm926, %v925, 0
      %933 = vmatprep.subr.bf16.mxu0 0
      %934 = vmatpush1.bf16.xpose.msra.mxu0 %v931
      %935 = vmatprep.subr.bf16.mxu0 0
      %936 = vmatpush1.bf16.xpose.msra.mxu0 0
      %937 = vmatprep.subr.bf16.mxu0 0
      %938 = vmatpush1.bf16.xpose.msra.mxu0 0
      %939 = vmatprep.subr.bf16.mxu0 0
      %940 = vmatpush1.bf16.xpose.msra.mxu0 0
      %941 = vmatprep.subr.bf16.mxu0 0
      %942 = vmatpush1.bf16.xpose.msra.mxu0 0
      %943 = vmatprep.subr.bf16.mxu0 0
      %944 = vmatpush1.bf16.xpose.msra.mxu0 0
      %945 = vmatprep.subr.bf16.mxu0 0
      %946 = vmatpush1.bf16.xpose.msra.mxu0 0
      %947 = vmatprep.subr.bf16.mxu0 0
      %948 = vmatpush1.bf16.xpose.msra.mxu0 0
      %949 = vmatprep.subr.bf16.mxu0 0
      %950 = vmatpush1.bf16.xpose.msra.mxu0 0
      %951 = vmatprep.subr.bf16.mxu0 0
      %952 = vmatpush1.bf16.xpose.msra.mxu0 0
      %953 = vmatprep.subr.bf16.mxu0 0
      %954 = vmatpush1.bf16.xpose.msra.mxu0 0
      %955 = vmatprep.subr.bf16.mxu0 0
      %956 = vmatpush1.bf16.xpose.msra.mxu0 0
      %957 = vmatprep.subr.bf16.mxu0 0
      %958 = vmatpush1.bf16.xpose.msra.mxu0 0
      %959 = vmatprep.subr.bf16.mxu0 0
      %960 = vmatpush1.bf16.xpose.msra.mxu0 0
      %961 = vmatprep.subr.bf16.mxu0 0
      %962 = vmatpush1.bf16.xpose.msra.mxu0 0
      %963 = vmatprep.subr.bf16.mxu0 0
      %964 = vmatpush1.bf16.xpose.msra.mxu0 0
      %965 = vmatprep.mubr.bf16.mxu0 0
      %966 = vmatmul.mubr.bf16.gmra.mrb[0].mxu0 %v928
      %v967 = vpop.f32.mrb[0].mxu0
      %v968 = vadd.f32 %v921, %v967
      %v969 = vpop.f32.mrb[0].mxu0
      %v970 = vpop.f32.mrb[0].mxu0
      %v971 = vadd.f32 %v921, %v970
      %v972 = vpop.f32.mrb[0].mxu0
      %973 = vdwg.mxu0
      %v974 = vsel %vm926, %v968, -inf
      %975 = vmax.xlane.f32.xlu0 %v974
      %v976 = vpop.xlane.xlu0 %975
      %v977 = vsel %vm926, %v971, -inf
      %978 = vmax.xlane.f32.xlu0 %v977
      %v979 = vpop.xlane.xlu0 %978
      %v980 = vsub.f32 %v968, %v976
      %v981 = vsub.f32 %v971, %v979
      %v982 = vmul.f32 %v980, 1.442695
      %v983 = vpow.pop %v982
      %v984 = vmul.f32 %v981, 1.442695
      %v985 = vpow.pop %v984
      %v986 = vsel %vm926, %v983, 0.0
      %987 = vadd.xlane.f32.xlu0 %v986
      %v988 = vpop.xlane.xlu0 %987
      %v989 = vsel %vm926, %v985, 0.0
      %990 = vadd.xlane.f32.xlu0 %v989
      %v991 = vpop.xlane.xlu0 %990
      %v992 = vrcp.pop %v988
      %v993 = vrcp.pop %v991
      %v994 = vmul.f32 %v983, %v992
      %v995 = vmul.f32 %v985, %v993
      %v996 = vpack.c.bf16 %v995, %v994
      %v997 = vpack.c.bf16 %v910, %v906
      %v999 = vsel %vm926, %v996, 0
      %1001 = vmatprep.subr.bf16.mxu0 0
      %1002 = vmatpush1.bf16.msra.mxu0 %v997
      %1003 = vmatprep.subr.bf16.mxu0 0
      %1004 = vmatpush1.bf16.msra.mxu0 0
      %1005 = vmatprep.subr.bf16.mxu0 0
      %1006 = vmatpush1.bf16.msra.mxu0 0
      %1007 = vmatprep.subr.bf16.mxu0 0
      %1008 = vmatpush1.bf16.msra.mxu0 0
      %1009 = vmatprep.subr.bf16.mxu0 0
      %1010 = vmatpush1.bf16.msra.mxu0 0
      %1011 = vmatprep.subr.bf16.mxu0 0
      %1012 = vmatpush1.bf16.msra.mxu0 0
      %1013 = vmatprep.subr.bf16.mxu0 0
      %1014 = vmatpush1.bf16.msra.mxu0 0
      %1015 = vmatprep.subr.bf16.mxu0 0
      %1016 = vmatpush1.bf16.msra.mxu0 0
      %1017 = vmatprep.subr.bf16.mxu0 0
      %1018 = vmatpush1.bf16.msra.mxu0 0
      %1019 = vmatprep.subr.bf16.mxu0 0
      %1020 = vmatpush1.bf16.msra.mxu0 0
      %1021 = vmatprep.subr.bf16.mxu0 0
      %1022 = vmatpush1.bf16.msra.mxu0 0
      %1023 = vmatprep.subr.bf16.mxu0 0
      %1024 = vmatpush1.bf16.msra.mxu0 0
      %1025 = vmatprep.subr.bf16.mxu0 0
      %1026 = vmatpush1.bf16.msra.mxu0 0
      %1027 = vmatprep.subr.bf16.mxu0 0
      %1028 = vmatpush1.bf16.msra.mxu0 0
      %1029 = vmatprep.subr.bf16.mxu0 0
      %1030 = vmatpush1.bf16.msra.mxu0 0
      %1031 = vmatprep.subr.bf16.mxu0 0
      %1032 = vmatpush1.bf16.msra.mxu0 0
      %1033 = vmatprep.mubr.bf16.mxu0 0
      %1034 = vmatmul.mubr.bf16.gmra.mrb[0].mxu0 %v999
      %v1035 = vpop.f32.mrb[0].mxu0
      %v1036 = vadd.f32 0.0, %v1035
      %v1037 = vpop.f32.mrb[0].mxu0
      %v1038 = vpop.f32.mrb[0].mxu0
      %v1039 = vadd.f32 0.0, %v1038
      %v1040 = vpop.f32.mrb[0].mxu0
      %1041 = vdwg.mxu0
      %v1042 = vpack.c.bf16 %v1039, %v1036
      %1043 = vst.msk [vmem:[#allocation3] sm:$0xff] %vm926, %v1042
      %1045 = vrot.lane.b32.xlu0 %v915, 112
      %v1046 = vpop.permute.xlu0 %1045
      %1047 = vrot.lane.b32.xlu0 %v916, 48
      %v1048 = vpop.permute.xlu0 %1047
      %v1050 = vsel %vm926, %v1046, 0
      %v1053 = vsel %vm926, %v1048, 0
      %1055 = vmatprep.subr.bf16.mxu0 0
      %1056 = vmatpush1.bf16.xpose.msra.mxu0 %v1053
      %1057 = vmatprep.subr.bf16.mxu0 0
      %1058 = vmatpush1.bf16.xpose.msra.mxu0 0
      %1059 = vmatprep.subr.bf16.mxu0 0
      %1060 = vmatpush1.bf16.xpose.msra.mxu0 0
      %1061 = vmatprep.subr.bf16.mxu0 0
      %1062 = vmatpush1.bf16.xpose.msra.mxu0 0
      %1063 = vmatprep.subr.bf16.mxu0 0
      %1064 = vmatpush1.bf16.xpose.msra.mxu0 0
      %1065 = vmatprep.subr.bf16.mxu0 0
      %1066 = vmatpush1.bf16.xpose.msra.mxu0 0
      %1067 = vmatprep.subr.bf16.mxu0 0
      %1068 = vmatpush1.bf16.xpose.msra.mxu0 0
      %1069 = vmatprep.subr.bf16.mxu0 0
      %1070 = vmatpush1.bf16.xpose.msra.mxu0 0
      %1071 = vmatprep.subr.bf16.mxu0 0
      %1072 = vmatpush1.bf16.xpose.msra.mxu0 0
      %1073 = vmatprep.subr.bf16.mxu0 0
      %1074 = vmatpush1.bf16.xpose.msra.mxu0 0
      %1075 = vmatprep.subr.bf16.mxu0 0
      %1076 = vmatpush1.bf16.xpose.msra.mxu0 0
      %1077 = vmatprep.subr.bf16.mxu0 0
      %1078 = vmatpush1.bf16.xpose.msra.mxu0 0
      %1079 = vmatprep.subr.bf16.mxu0 0
      %1080 = vmatpush1.bf16.xpose.msra.mxu0 0
      %1081 = vmatprep.subr.bf16.mxu0 0
      %1082 = vmatpush1.bf16.xpose.msra.mxu0 0
      %1083 = vmatprep.subr.bf16.mxu0 0
      %1084 = vmatpush1.bf16.xpose.msra.mxu0 0
      %1085 = vmatprep.subr.bf16.mxu0 0
      %1086 = vmatpush1.bf16.xpose.msra.mxu0 0
      %1087 = vmatprep.mubr.bf16.mxu0 0
      %1088 = vmatmul.mubr.bf16.gmra.mrb[0].mxu0 %v1050
      %v1089 = vpop.f32.mrb[0].mxu0
      %v1090 = vadd.f32 %v921, %v1089
      %v1091 = vpop.f32.mrb[0].mxu0
      %v1092 = vpop.f32.mrb[0].mxu0
      %v1093 = vadd.f32 %v921, %v1092
      %v1094 = vpop.f32.mrb[0].mxu0
      %1095 = vdwg.mxu0
      %v1096 = vsel %vm926, %v1090, -inf
      %1097 = vmax.xlane.f32.xlu0 %v1096
      %v1098 = vpop.xlane.xlu0 %1097
      %v1099 = vsel %vm926, %v1093, -inf
      %1100 = vmax.xlane.f32.xlu0 %v1099
      %v1101 = vpop.xlane.xlu0 %1100
      %v1102 = vsub.f32 %v1090, %v1098
      %v1103 = vsub.f32 %v1093, %v1101
      %v1104 = vmul.f32 %v1102, 1.442695
      %v1105 = vpow.pop %v1104
      %v1106 = vmul.f32 %v1103, 1.442695
      %v1107 = vpow.pop %v1106
      %v1108 = vsel %vm926, %v1105, 0.0
      %1109 = vadd.xlane.f32.xlu0 %v1108
      %v1110 = vpop.xlane.xlu0 %1109
      %v1111 = vsel %vm926, %v1107, 0.0
      %1112 = vadd.xlane.f32.xlu0 %v1111
      %v1113 = vpop.xlane.xlu0 %1112
      %v1114 = vrcp.pop %v1110
      %v1115 = vrcp.pop %v1113
      %v1116 = vmul.f32 %v1105, %v1114
      %v1117 = vmul.f32 %v1107, %v1115
      %v1118 = vpack.c.bf16 %v1117, %v1116
      %1120 = vrot.lane.b32.xlu0 %v997, 112
      %v1121 = vpop.permute.xlu0 %1120
      %v1124 = vsel %vm926, %v1118, 0
      %1126 = vmatprep.subr.bf16.mxu0 0
      %1127 = vmatpush1.bf16.msra.mxu0 %v1121
      %1128 = vmatprep.subr.bf16.mxu0 0
      %1129 = vmatpush1.bf16.msra.mxu0 0
      %1130 = vmatprep.subr.bf16.mxu0 0
      %1131 = vmatpush1.bf16.msra.mxu0 0
      %1132 = vmatprep.subr.bf16.mxu0 0
      %1133 = vmatpush1.bf16.msra.mxu0 0
      %1134 = vmatprep.subr.bf16.mxu0 0
      %1135 = vmatpush1.bf16.msra.mxu0 0
      %1136 = vmatprep.subr.bf16.mxu0 0
      %1137 = vmatpush1.bf16.msra.mxu0 0
      %1138 = vmatprep.subr.bf16.mxu0 0
      %1139 = vmatpush1.bf16.msra.mxu0 0
      %1140 = vmatprep.subr.bf16.mxu0 0
      %1141 = vmatpush1.bf16.msra.mxu0 0
      %1142 = vmatprep.subr.bf16.mxu0 0
      %1143 = vmatpush1.bf16.msra.mxu0 0
      %1144 = vmatprep.subr.bf16.mxu0 0
      %1145 = vmatpush1.bf16.msra.mxu0 0
      %1146 = vmatprep.subr.bf16.mxu0 0
      %1147 = vmatpush1.bf16.msra.mxu0 0
      %1148 = vmatprep.subr.bf16.mxu0 0
      %1149 = vmatpush1.bf16.msra.mxu0 0
      %1150 = vmatprep.subr.bf16.mxu0 0
      %1151 = vmatpush1.bf16.msra.mxu0 0
      %1152 = vmatprep.subr.bf16.mxu0 0
      %1153 = vmatpush1.bf16.msra.mxu0 0
      %1154 = vmatprep.subr.bf16.mxu0 0
      %1155 = vmatpush1.bf16.msra.mxu0 0
      %1156 = vmatprep.subr.bf16.mxu0 0
      %1157 = vmatpush1.bf16.msra.mxu0 0
      %1158 = vmatprep.mubr.bf16.mxu0 0
      %1159 = vmatmul.mubr.bf16.gmra.mrb[0].mxu0 %v1124
      %v1160 = vpop.f32.mrb[0].mxu0
      %v1161 = vadd.f32 0.0, %v1160
      %v1162 = vpop.f32.mrb[0].mxu0
      %v1163 = vpop.f32.mrb[0].mxu0
      %v1164 = vadd.f32 0.0, %v1163
      %v1165 = vpop.f32.mrb[0].mxu0
      %1166 = vdwg.mxu0
      %v1167 = vpack.c.bf16 %v1164, %v1161
      %1169 = vrot.lane.b32.xlu0 %v1167, 16
      %v1170 = vpop.permute.xlu0 %1169
      %vm1172 = vcmask 261248
      %1173 = vst.msk [vmem:[#allocation3] sm:$0xff] %vm1172, %v1170
      %1174 = vrot.lane.b32.xlu0 %v915, 96
      %v1175 = vpop.permute.xlu0 %1174
      %1176 = vrot.lane.b32.xlu0 %v916, 32
      %v1177 = vpop.permute.xlu0 %1176
      %v1179 = vsel %vm926, %v1175, 0
      %v1182 = vsel %vm926, %v1177, 0
      %1184 = vmatprep.subr.bf16.mxu0 0
      %1185 = vmatpush1.bf16.xpose.msra.mxu0 %v1182
      %1186 = vmatprep.subr.bf16.mxu0 0
      %1187 = vmatpush1.bf16.xpose.msra.mxu0 0
      %1188 = vmatprep.subr.bf16.mxu0 0
      %1189 = vmatpush1.bf16.xpose.msra.mxu0 0
      %1190 = vmatprep.subr.bf16.mxu0 0
      %1191 = vmatpush1.bf16.xpose.msra.mxu0 0
      %1192 = vmatprep.subr.bf16.mxu0 0
      %1193 = vmatpush1.bf16.xpose.msra.mxu0 0
      %1194 = vmatprep.subr.bf16.mxu0 0
      %1195 = vmatpush1.bf16.xpose.msra.mxu0 0
      %1196 = vmatprep.subr.bf16.mxu0 0
      %1197 = vmatpush1.bf16.xpose.msra.mxu0 0
      %1198 = vmatprep.subr.bf16.mxu0 0
      %1199 = vmatpush1.bf16.xpose.msra.mxu0 0
      %1200 = vmatprep.subr.bf16.mxu0 0
      %1201 = vmatpush1.bf16.xpose.msra.mxu0 0
      %1202 = vmatprep.subr.bf16.mxu0 0
      %1203 = vmatpush1.bf16.xpose.msra.mxu0 0
      %1204 = vmatprep.subr.bf16.mxu0 0
      %1205 = vmatpush1.bf16.xpose.msra.mxu0 0
      %1206 = vmatprep.subr.bf16.mxu0 0
      %1207 = vmatpush1.bf16.xpose.msra.mxu0 0
      %1208 = vmatprep.subr.bf16.mxu0 0
      %1209 = vmatpush1.bf16.xpose.msra.mxu0 0
      %1210 = vmatprep.subr.bf16.mxu0 0
      %1211 = vmatpush1.bf16.xpose.msra.mxu0 0
      %1212 = vmatprep.subr.bf16.mxu0 0
      %1213 = vmatpush1.bf16.xpose.msra.mxu0 0
      %1214 = vmatprep.subr.bf16.mxu0 0
      %1215 = vmatpush1.bf16.xpose.msra.mxu0 0
      %1216 = vmatprep.mubr.bf16.mxu0 0
      %1217 = vmatmul.mubr.bf16.gmra.mrb[0].mxu0 %v1179
      %v1218 = vpop.f32.mrb[0].mxu0
      %v1219 = vadd.f32 %v921, %v1218
      %v1220 = vpop.f32.mrb[0].mxu0
      %v1221 = vpop.f32.mrb[0].mxu0
      %v1222 = vadd.f32 %v921, %v1221
      %v1223 = vpop.f32.mrb[0].mxu0
      %1224 = vdwg.mxu0
      %v1225 = vsel %vm926, %v1219, -inf
      %1226 = vmax.xlane.f32.xlu0 %v1225
      %v1227 = vpop.xlane.xlu0 %1226
      %v1228 = vsel %vm926, %v1222, -inf
      %1229 = vmax.xlane.f32.xlu0 %v1228
      %v1230 = vpop.xlane.xlu0 %1229
      %v1231 = vsub.f32 %v1219, %v1227
      %v1232 = vsub.f32 %v1222, %v1230
      %v1233 = vmul.f32 %v1231, 1.442695
      %v1234 = vpow.pop %v1233
      %v1235 = vmul.f32 %v1232, 1.442695
      %v1236 = vpow.pop %v1235
      %v1237 = vsel %vm926, %v1234, 0.0
      %1238 = vadd.xlane.f32.xlu0 %v1237
      %v1239 = vpop.xlane.xlu0 %1238
      %v1240 = vsel %vm926, %v1236, 0.0
      %1241 = vadd.xlane.f32.xlu0 %v1240
      %v1242 = vpop.xlane.xlu0 %1241
      %v1243 = vrcp.pop %v1239
      %v1244 = vrcp.pop %v1242
      %v1245 = vmul.f32 %v1234, %v1243
      %v1246 = vmul.f32 %v1236, %v1244
      %v1247 = vpack.c.bf16 %v1246, %v1245
      %1248 = vrot.lane.b32.xlu0 %v997, 96
      %v1249 = vpop.permute.xlu0 %1248
      %v1252 = vsel %vm926, %v1247, 0
      %1254 = vmatprep.subr.bf16.mxu0 0
      %1255 = vmatpush1.bf16.msra.mxu0 %v1249
      %1256 = vmatprep.subr.bf16.mxu0 0
      %1257 = vmatpush1.bf16.msra.mxu0 0
      %1258 = vmatprep.subr.bf16.mxu0 0
      %1259 = vmatpush1.bf16.msra.mxu0 0
      %1260 = vmatprep.subr.bf16.mxu0 0
      %1261 = vmatpush1.bf16.msra.mxu0 0
      %1262 = vmatprep.subr.bf16.mxu0 0
      %1263 = vmatpush1.bf16.msra.mxu0 0
      %1264 = vmatprep.subr.bf16.mxu0 0
      %1265 = vmatpush1.bf16.msra.mxu0 0
      %1266 = vmatprep.subr.bf16.mxu0 0
      %1267 = vmatpush1.bf16.msra.mxu0 0
      %1268 = vmatprep.subr.bf16.mxu0 0
      %1269 = vmatpush1.bf16.msra.mxu0 0
      %1270 = vmatprep.subr.bf16.mxu0 0
      %1271 = vmatpush1.bf16.msra.mxu0 0
      %1272 = vmatprep.subr.bf16.mxu0 0
      %1273 = vmatpush1.bf16.msra.mxu0 0
      %1274 = vmatprep.subr.bf16.mxu0 0
      %1275 = vmatpush1.bf16.msra.mxu0 0
      %1276 = vmatprep.subr.bf16.mxu0 0
      %1277 = vmatpush1.bf16.msra.mxu0 0
      %1278 = vmatprep.subr.bf16.mxu0 0
      %1279 = vmatpush1.bf16.msra.mxu0 0
      %1280 = vmatprep.subr.bf16.mxu0 0
      %1281 = vmatpush1.bf16.msra.mxu0 0
      %1282 = vmatprep.subr.bf16.mxu0 0
      %1283 = vmatpush1.bf16.msra.mxu0 0
      %1284 = vmatprep.subr.bf16.mxu0 0
      %1285 = vmatpush1.bf16.msra.mxu0 0
      %1286 = vmatprep.mubr.bf16.mxu0 0
      %1287 = vmatmul.mubr.bf16.gmra.mrb[0].mxu0 %v1252
      %v1288 = vpop.f32.mrb[0].mxu0
      %v1289 = vadd.f32 0.0, %v1288
      %v1290 = vpop.f32.mrb[0].mxu0
      %v1291 = vpop.f32.mrb[0].mxu0
      %v1292 = vadd.f32 0.0, %v1291
      %v1293 = vpop.f32.mrb[0].mxu0
      %1294 = vdwg.mxu0
      %v1295 = vpack.c.bf16 %v1292, %v1289
      %1297 = vrot.lane.b32.xlu0 %v1295, 32
      %v1298 = vpop.permute.xlu0 %1297
      %vm1300 = vcmask 392448
      %1301 = vst.msk [vmem:[#allocation3] sm:$0xff] %vm1300, %v1298
      %1302 = vrot.lane.b32.xlu0 %v915, 80
      %v1303 = vpop.permute.xlu0 %1302
      %1304 = vrot.lane.b32.xlu0 %v916, 16
      %v1305 = vpop.permute.xlu0 %1304
      %v1307 = vsel %vm926, %v1303, 0
      %v1310 = vsel %vm926, %v1305, 0
      %1312 = vmatprep.subr.bf16.mxu0 0
      %1313 = vmatpush1.bf16.xpose.msra.mxu0 %v1310
      %1314 = vmatprep.subr.bf16.mxu0 0
      %1315 = vmatpush1.bf16.xpose.msra.mxu0 0
      %1316 = vmatprep.subr.bf16.mxu0 0
      %1317 = vmatpush1.bf16.xpose.msra.mxu0 0
      %1318 = vmatprep.subr.bf16.mxu0 0
      %1319 = vmatpush1.bf16.xpose.msra.mxu0 0
      %1320 = vmatprep.subr.bf16.mxu0 0
      %1321 = vmatpush1.bf16.xpose.msra.mxu0 0
      %1322 = vmatprep.subr.bf16.mxu0 0
      %1323 = vmatpush1.bf16.xpose.msra.mxu0 0
      %1324 = vmatprep.subr.bf16.mxu0 0
      %1325 = vmatpush1.bf16.xpose.msra.mxu0 0
      %1326 = vmatprep.subr.bf16.mxu0 0
      %1327 = vmatpush1.bf16.xpose.msra.mxu0 0
      %1328 = vmatprep.subr.bf16.mxu0 0
      %1329 = vmatpush1.bf16.xpose.msra.mxu0 0
      %1330 = vmatprep.subr.bf16.mxu0 0
      %1331 = vmatpush1.bf16.xpose.msra.mxu0 0
      %1332 = vmatprep.subr.bf16.mxu0 0
      %1333 = vmatpush1.bf16.xpose.msra.mxu0 0
      %1334 = vmatprep.subr.bf16.mxu0 0
      %1335 = vmatpush1.bf16.xpose.msra.mxu0 0
      %1336 = vmatprep.subr.bf16.mxu0 0
      %1337 = vmatpush1.bf16.xpose.msra.mxu0 0
      %1338 = vmatprep.subr.bf16.mxu0 0
      %1339 = vmatpush1.bf16.xpose.msra.mxu0 0
      %1340 = vmatprep.subr.bf16.mxu0 0
      %1341 = vmatpush1.bf16.xpose.msra.mxu0 0
      %1342 = vmatprep.subr.bf16.mxu0 0
      %1343 = vmatpush1.bf16.xpose.msra.mxu0 0
      %1344 = vmatprep.mubr.bf16.mxu0 0
      %1345 = vmatmul.mubr.bf16.gmra.mrb[0].mxu0 %v1307
      %v1346 = vpop.f32.mrb[0].mxu0
      %v1347 = vadd.f32 %v921, %v1346
      %v1348 = vpop.f32.mrb[0].mxu0
      %v1349 = vpop.f32.mrb[0].mxu0
      %v1350 = vadd.f32 %v921, %v1349
      %v1351 = vpop.f32.mrb[0].mxu0
      %1352 = vdwg.mxu0
      %v1353 = vsel %vm926, %v1347, -inf
      %1354 = vmax.xlane.f32.xlu0 %v1353
      %v1355 = vpop.xlane.xlu0 %1354
      %v1356 = vsel %vm926, %v1350, -inf
      %1357 = vmax.xlane.f32.xlu0 %v1356
      %v1358 = vpop.xlane.xlu0 %1357
      %v1359 = vsub.f32 %v1347, %v1355
      %v1360 = vsub.f32 %v1350, %v1358
      %v1361 = vmul.f32 %v1359, 1.442695
      %v1362 = vpow.pop %v1361
      %v1363 = vmul.f32 %v1360, 1.442695
      %v1364 = vpow.pop %v1363
      %v1365 = vsel %vm926, %v1362, 0.0
      %1366 = vadd.xlane.f32.xlu0 %v1365
      %v1367 = vpop.xlane.xlu0 %1366
      %v1368 = vsel %vm926, %v1364, 0.0
      %1369 = vadd.xlane.f32.xlu0 %v1368
      %v1370 = vpop.xlane.xlu0 %1369
      %v1371 = vrcp.pop %v1367
      %v1372 = vrcp.pop %v1370
      %v1373 = vmul.f32 %v1362, %v1371
      %v1374 = vmul.f32 %v1364, %v1372
      %v1375 = vpack.c.bf16 %v1374, %v1373
      %1376 = vrot.lane.b32.xlu0 %v997, 80
      %v1377 = vpop.permute.xlu0 %1376
      %v1380 = vsel %vm926, %v1375, 0
      %1382 = vmatprep.subr.bf16.mxu0 0
      %1383 = vmatpush1.bf16.msra.mxu0 %v1377
      %1384 = vmatprep.subr.bf16.mxu0 0
      %1385 = vmatpush1.bf16.msra.mxu0 0
      %1386 = vmatprep.subr.bf16.mxu0 0
      %1387 = vmatpush1.bf16.msra.mxu0 0
      %1388 = vmatprep.subr.bf16.mxu0 0
      %1389 = vmatpush1.bf16.msra.mxu0 0
      %1390 = vmatprep.subr.bf16.mxu0 0
      %1391 = vmatpush1.bf16.msra.mxu0 0
      %1392 = vmatprep.subr.bf16.mxu0 0
      %1393 = vmatpush1.bf16.msra.mxu0 0
      %1394 = vmatprep.subr.bf16.mxu0 0
      %1395 = vmatpush1.bf16.msra.mxu0 0
      %1396 = vmatprep.subr.bf16.mxu0 0
      %1397 = vmatpush1.bf16.msra.mxu0 0
      %1398 = vmatprep.subr.bf16.mxu0 0
      %1399 = vmatpush1.bf16.msra.mxu0 0
      %1400 = vmatprep.subr.bf16.mxu0 0
      %1401 = vmatpush1.bf16.msra.mxu0 0
      %1402 = vmatprep.subr.bf16.mxu0 0
      %1403 = vmatpush1.bf16.msra.mxu0 0
      %1404 = vmatprep.subr.bf16.mxu0 0
      %1405 = vmatpush1.bf16.msra.mxu0 0
      %1406 = vmatprep.subr.bf16.mxu0 0
      %1407 = vmatpush1.bf16.msra.mxu0 0
      %1408 = vmatprep.subr.bf16.mxu0 0
      %1409 = vmatpush1.bf16.msra.mxu0 0
      %1410 = vmatprep.subr.bf16.mxu0 0
      %1411 = vmatpush1.bf16.msra.mxu0 0
      %1412 = vmatprep.subr.bf16.mxu0 0
      %1413 = vmatpush1.bf16.msra.mxu0 0
      %1414 = vmatprep.mubr.bf16.mxu0 0
      %1415 = vmatmul.mubr.bf16.gmra.mrb[0].mxu0 %v1380
      %v1416 = vpop.f32.mrb[0].mxu0
      %v1417 = vadd.f32 0.0, %v1416
      %v1418 = vpop.f32.mrb[0].mxu0
      %v1419 = vpop.f32.mrb[0].mxu0
      %v1420 = vadd.f32 0.0, %v1419
      %v1421 = vpop.f32.mrb[0].mxu0
      %1422 = vdwg.mxu0
      %v1423 = vpack.c.bf16 %v1420, %v1417
      %1425 = vrot.lane.b32.xlu0 %v1423, 48
      %v1426 = vpop.permute.xlu0 %1425
      %vm1428 = vcmask 523648
      %1429 = vst.msk [vmem:[#allocation3] sm:$0xff] %vm1428, %v1426
      %v1430 = vld [vmem:[#allocation3] sm:$0xff]
      %v1431 = vld [vmem:[%s660] sm:$0xf]
      %v1432 = vld [vmem:[%s660 + $0x4] sm:$0xf]
      %v1433 = vld [vmem:[%s660 + $0x8] sm:$0xf]
      %v1434 = vld [vmem:[%s660 + $0xc] sm:$0xf]
      %v1435 = vld [vmem:[%s660 + $0x10] sm:$0xf]
      %v1436 = vld [vmem:[%s660 + $0x14] sm:$0xf]
      %v1437 = vld [vmem:[%s660 + $0x18] sm:$0xf]
      %v1438 = vld [vmem:[%s660 + $0x1c] sm:$0xf]
      %v1439 = vld [vmem:[%s663] sm:$0x1]
      %v1441 = vlaneseq
      %v1442 = vshrl.u32 %v1441, 7
      %v1443 = vsub.s32 0, %v1442
      %v1444 = vrot.slane %v1439, %v1443
      %v1454 = vunpack.c.l.b16 %v1431
      %v1455 = vunpack.c.l.b16 %v1432
      %v1456 = vunpack.c.l.b16 %v1433
      %v1457 = vunpack.c.l.b16 %v1434
      %v1458 = vunpack.c.l.b16 %v1435
      %v1459 = vunpack.c.l.b16 %v1436
      %v1460 = vunpack.c.l.b16 %v1437
      %v1461 = vunpack.c.l.b16 %v1438
      %v1462 = vpack.c.b16 %v1455, %v1454
      %v1463 = vpack.c.b16 %v1457, %v1456
      %v1464 = vpack.c.b16 %v1459, %v1458
      %v1465 = vpack.c.b16 %v1461, %v1460
      %v1471 = vsel %vm865, %v1430, 0
      %1473 = vmatprep.subr.bf16.mxu0 0
      %1474 = vmatpush1.bf16.msra.mxu0 %v1462
      %1475 = vmatprep.subr.bf16.mxu0 0
      %1476 = vmatpush1.bf16.msra.mxu0 %v1463
      %1477 = vmatprep.subr.bf16.mxu0 0
      %1478 = vmatpush1.bf16.msra.mxu0 %v1464
      %1479 = vmatprep.subr.bf16.mxu0 0
      %1480 = vmatpush1.bf16.msra.mxu0 %v1465
      %1481 = vmatprep.subr.bf16.mxu0 0
      %1482 = vmatpush1.bf16.msra.mxu0 0
      %1483 = vmatprep.subr.bf16.mxu0 0
      %1484 = vmatpush1.bf16.msra.mxu0 0
      %1485 = vmatprep.subr.bf16.mxu0 0
      %1486 = vmatpush1.bf16.msra.mxu0 0
      %1487 = vmatprep.subr.bf16.mxu0 0
      %1488 = vmatpush1.bf16.msra.mxu0 0
      %1489 = vmatprep.subr.bf16.mxu0 0
      %1490 = vmatpush1.bf16.msra.mxu0 0
      %1491 = vmatprep.subr.bf16.mxu0 0
      %1492 = vmatpush1.bf16.msra.mxu0 0
      %1493 = vmatprep.subr.bf16.mxu0 0
      %1494 = vmatpush1.bf16.msra.mxu0 0
      %1495 = vmatprep.subr.bf16.mxu0 0
      %1496 = vmatpush1.bf16.msra.mxu0 0
      %1497 = vmatprep.subr.bf16.mxu0 0
      %1498 = vmatpush1.bf16.msra.mxu0 0
      %1499 = vmatprep.subr.bf16.mxu0 0
      %1500 = vmatpush1.bf16.msra.mxu0 0
      %1501 = vmatprep.subr.bf16.mxu0 0
      %1502 = vmatpush1.bf16.msra.mxu0 0
      %1503 = vmatprep.subr.bf16.mxu0 0
      %1504 = vmatpush1.bf16.msra.mxu0 0
      %1505 = vmatprep.mubr.bf16.mxu0 0
      %1506 = vmatmul.mubr.bf16.gmra.mrb[0].mxu0 %v1471
      %v1507 = vpop.f32.mrb[0].mxu0
      %v1508 = vadd.f32 %v1444, %v1507
      %v1509 = vpop.f32.mrb[0].mxu0
      %v1510 = vpop.f32.mrb[0].mxu0
      %v1511 = vadd.f32 %v1444, %v1510
      %v1512 = vpop.f32.mrb[0].mxu0
      %1513 = vdwg.mxu0
      %v1514 = vadd.f32 %v802, %v1508
      %v1515 = vadd.f32 %v803, %v1511
      %v1516 = vld [vmem:[%s666] sm:$0x1]
      %v1517 = vld [vmem:[%s669] sm:$0x1]
      %v1518 = vsel %vm865, %v1514, 0.0
      %1519 = vadd.xlane.f32.xlu0 %v1518
      %v1520 = vpop.xlane.xlu0 %1519
      %v1521 = vsel %vm865, %v1515, 0.0
      %1522 = vadd.xlane.f32.xlu0 %v1521
      %v1523 = vpop.xlane.xlu0 %1522
      %v1524 = vrcp.pop 64.0
      %v1525 = vmul.f32 %v1520, %v1524
      %v1526 = vmul.f32 %v1523, %v1524
      %v1527 = vsub.f32 %v1514, %v1525
      %v1528 = vsub.f32 %v1515, %v1526
      %v1529 = vmul.f32 %v1527, %v1527
      %v1530 = vmul.f32 %v1528, %v1528
      %v1531 = vsel %vm865, %v1529, 0.0
      %1532 = vadd.xlane.f32.xlu0 %v1531
      %v1533 = vpop.xlane.xlu0 %1532
      %v1534 = vsel %vm865, %v1530, 0.0
      %1535 = vadd.xlane.f32.xlu0 %v1534
      %v1536 = vpop.xlane.xlu0 %1535
      %v1537 = vmul.f32 %v1533, %v1524
      %v1538 = vmul.f32 %v1536, %v1524
      %v1539 = vadd.f32 %v1537, 1e-07
      %v1540 = vadd.f32 %v1538, 1e-07
      %v1541 = vrsqrt.pop %v1539
      %v1542 = vrsqrt.pop %v1540
      %v1543 = vmul.f32 %v1527, %v1541
      %v1544 = vmul.f32 %v1528, %v1542
      %v1546 = vlaneseq
      %v1547 = vshrl.u32 %v1546, 7
      %v1548 = vsub.s32 0, %v1547
      %v1549 = vrot.slane %v1516, %v1548
      %v1551 = vmul.f32 %v1543, %v1549
      %v1552 = vmul.f32 %v1544, %v1549
      %v1554 = vlaneseq
      %v1555 = vshrl.u32 %v1554, 7
      %v1556 = vsub.s32 0, %v1555
      %v1557 = vrot.slane %v1517, %v1556
      %v1559 = vadd.f32 %v1551, %v1557
      %v1560 = vadd.f32 %v1552, %v1557
      %v1561 = vpack.c.bf16 %v1560, %v1559
      %v1562 = vld [vmem:[%s674] sm:$0xf]
      %v1563 = vld [vmem:[%s674 + $0x4] sm:$0xf]
      %v1564 = vld [vmem:[%s674 + $0x8] sm:$0xf]
      %v1565 = vld [vmem:[%s674 + $0xc] sm:$0xf]
      %v1566 = vld [vmem:[%s674 + $0x10] sm:$0xf]
      %v1567 = vld [vmem:[%s674 + $0x14] sm:$0xf]
      %v1568 = vld [vmem:[%s674 + $0x18] sm:$0xf]
      %v1569 = vld [vmem:[%s674 + $0x1c] sm:$0xf]
      %v1570 = vld [vmem:[%s677] sm:$0x1]
      %v1572 = vlaneseq
      %v1573 = vshrl.u32 %v1572, 7
      %v1574 = vsub.s32 0, %v1573
      %v1575 = vrot.slane %v1570, %v1574
      %v1585 = vunpack.c.l.b16 %v1562
      %v1586 = vunpack.c.l.b16 %v1563
      %v1587 = vunpack.c.l.b16 %v1564
      %v1588 = vunpack.c.l.b16 %v1565
      %v1589 = vunpack.c.l.b16 %v1566
      %v1590 = vunpack.c.l.b16 %v1567
      %v1591 = vunpack.c.l.b16 %v1568
      %v1592 = vunpack.c.l.b16 %v1569
      %v1593 = vpack.c.b16 %v1586, %v1585
      %v1594 = vpack.c.b16 %v1588, %v1587
      %v1595 = vpack.c.b16 %v1590, %v1589
      %v1596 = vpack.c.b16 %v1592, %v1591
      %v1602 = vsel %vm865, %v1561, 0
      %1604 = vmatprep.subr.bf16.mxu0 0
      %1605 = vmatpush1.bf16.msra.mxu0 %v1593
      %1606 = vmatprep.subr.bf16.mxu0 0
      %1607 = vmatpush1.bf16.msra.mxu0 %v1594
      %1608 = vmatprep.subr.bf16.mxu0 0
      %1609 = vmatpush1.bf16.msra.mxu0 %v1595
      %1610 = vmatprep.subr.bf16.mxu0 0
      %1611 = vmatpush1.bf16.msra.mxu0 %v1596
      %1612 = vmatprep.subr.bf16.mxu0 0
      %1613 = vmatpush1.bf16.msra.mxu0 0
      %1614 = vmatprep.subr.bf16.mxu0 0
      %1615 = vmatpush1.bf16.msra.mxu0 0
      %1616 = vmatprep.subr.bf16.mxu0 0
      %1617 = vmatpush1.bf16.msra.mxu0 0
      %1618 = vmatprep.subr.bf16.mxu0 0
      %1619 = vmatpush1.bf16.msra.mxu0 0
      %1620 = vmatprep.subr.bf16.mxu0 0
      %1621 = vmatpush1.bf16.msra.mxu0 0
      %1622 = vmatprep.subr.bf16.mxu0 0
      %1623 = vmatpush1.bf16.msra.mxu0 0
      %1624 = vmatprep.subr.bf16.mxu0 0
      %1625 = vmatpush1.bf16.msra.mxu0 0
      %1626 = vmatprep.subr.bf16.mxu0 0
      %1627 = vmatpush1.bf16.msra.mxu0 0
      %1628 = vmatprep.subr.bf16.mxu0 0
      %1629 = vmatpush1.bf16.msra.mxu0 0
      %1630 = vmatprep.subr.bf16.mxu0 0
      %1631 = vmatpush1.bf16.msra.mxu0 0
      %1632 = vmatprep.subr.bf16.mxu0 0
      %1633 = vmatpush1.bf16.msra.mxu0 0
      %1634 = vmatprep.subr.bf16.mxu0 0
      %1635 = vmatpush1.bf16.msra.mxu0 0
      %1636 = vmatprep.mubr.bf16.mxu0 0
      %1637 = vmatmul.mubr.bf16.gmra.mrb[0].mxu0 %v1602
      %v1638 = vpop.f32.mrb[0].mxu0
      %v1639 = vadd.f32 %v1575, %v1638
      %v1640 = vpop.f32.mrb[0].mxu0
      %v1641 = vpop.f32.mrb[0].mxu0
      %v1642 = vadd.f32 %v1575, %v1641
      %v1643 = vpop.f32.mrb[0].mxu0
      %1644 = vdwg.mxu0
      %v1645 = vmul.f32 %v1639, 0.5
      %v1646 = vmul.f32 %v1642, 0.5
      %v1647 = vmul.f32 %v1639, 0.044715
      %v1648 = vmul.f32 %v1642, 0.044715
      %v1649 = vmul.f32 %v1647, %v1639
      %v1650 = vmul.f32 %v1648, %v1642
      %v1651 = vmul.f32 %v1649, %v1639
      %v1652 = vmul.f32 %v1650, %v1642
      %v1653 = vadd.f32 %v1639, %v1651
      %v1654 = vadd.f32 %v1642, %v1652
      %v1655 = vmul.f32 %v1653, 0.7978846
      %v1656 = vmul.f32 %v1654, 0.7978846
      %v1657 = vtanh.pop %v1655
      %v1658 = vtanh.pop %v1656
      %v1659 = vadd.f32 %v1657, 1.0
      %v1660 = vadd.f32 %v1658, 1.0
      %v1661 = vmul.f32 %v1645, %v1659
      %v1662 = vmul.f32 %v1646, %v1660
      %v1663 = vpack.c.bf16 %v1662, %v1661
      %v1664 = vld [vmem:[%s682] sm:$0xf]
      %v1665 = vld [vmem:[%s682 + $0x4] sm:$0xf]
      %v1666 = vld [vmem:[%s682 + $0x8] sm:$0xf]
      %v1667 = vld [vmem:[%s682 + $0xc] sm:$0xf]
      %v1668 = vld [vmem:[%s682 + $0x10] sm:$0xf]
      %v1669 = vld [vmem:[%s682 + $0x14] sm:$0xf]
      %v1670 = vld [vmem:[%s682 + $0x18] sm:$0xf]
      %v1671 = vld [vmem:[%s682 + $0x1c] sm:$0xf]
      %v1672 = vld [vmem:[%s682 + $0x20] sm:$0xf]
      %v1673 = vld [vmem:[%s682 + $0x24] sm:$0xf]
      %v1674 = vld [vmem:[%s682 + $0x28] sm:$0xf]
      %v1675 = vld [vmem:[%s682 + $0x2c] sm:$0xf]
      %v1676 = vld [vmem:[%s682 + $0x30] sm:$0xf]
      %v1677 = vld [vmem:[%s682 + $0x34] sm:$0xf]
      %v1678 = vld [vmem:[%s682 + $0x38] sm:$0xf]
      %v1679 = vld [vmem:[%s682 + $0x3c] sm:$0xf]
      %v1680 = vld [vmem:[%s685] sm:$0x1]
      %v1682 = vlaneseq
      %v1683 = vshrl.u32 %v1682, 7
      %v1684 = vsub.s32 0, %v1683
      %v1685 = vrot.slane %v1680, %v1684
      %v1703 = vunpack.c.l.b16 %v1664
      %v1704 = vunpack.c.l.b16 %v1665
      %v1705 = vunpack.c.l.b16 %v1666
      %v1706 = vunpack.c.l.b16 %v1667
      %v1707 = vunpack.c.l.b16 %v1668
      %v1708 = vunpack.c.l.b16 %v1669
      %v1709 = vunpack.c.l.b16 %v1670
      %v1710 = vunpack.c.l.b16 %v1671
      %v1711 = vunpack.c.l.b16 %v1672
      %v1712 = vunpack.c.l.b16 %v1673
      %v1713 = vunpack.c.l.b16 %v1674
      %v1714 = vunpack.c.l.b16 %v1675
      %v1715 = vunpack.c.l.b16 %v1676
      %v1716 = vunpack.c.l.b16 %v1677
      %v1717 = vunpack.c.l.b16 %v1678
      %v1718 = vunpack.c.l.b16 %v1679
      %v1719 = vpack.c.b16 %v1704, %v1703
      %v1720 = vpack.c.b16 %v1706, %v1705
      %v1721 = vpack.c.b16 %v1708, %v1707
      %v1722 = vpack.c.b16 %v1710, %v1709
      %v1723 = vpack.c.b16 %v1712, %v1711
      %v1724 = vpack.c.b16 %v1714, %v1713
      %v1725 = vpack.c.b16 %v1716, %v1715
      %v1726 = vpack.c.b16 %v1718, %v1717
      %1735 = vmatprep.subr.bf16.mxu0 0
      %1736 = vmatpush1.bf16.msra.mxu0 %v1719
      %1737 = vmatprep.subr.bf16.mxu0 0
      %1738 = vmatpush1.bf16.msra.mxu0 %v1720
      %1739 = vmatprep.subr.bf16.mxu0 0
      %1740 = vmatpush1.bf16.msra.mxu0 %v1721
      %1741 = vmatprep.subr.bf16.mxu0 0
      %1742 = vmatpush1.bf16.msra.mxu0 %v1722
      %1743 = vmatprep.subr.bf16.mxu0 0
      %1744 = vmatpush1.bf16.msra.mxu0 %v1723
      %1745 = vmatprep.subr.bf16.mxu0 0
      %1746 = vmatpush1.bf16.msra.mxu0 %v1724
      %1747 = vmatprep.subr.bf16.mxu0 0
      %1748 = vmatpush1.bf16.msra.mxu0 %v1725
      %1749 = vmatprep.subr.bf16.mxu0 0
      %1750 = vmatpush1.bf16.msra.mxu0 %v1726
      %1751 = vmatprep.subr.bf16.mxu0 0
      %1752 = vmatpush1.bf16.msra.mxu0 0
      %1753 = vmatprep.subr.bf16.mxu0 0
      %1754 = vmatpush1.bf16.msra.mxu0 0
      %1755 = vmatprep.subr.bf16.mxu0 0
      %1756 = vmatpush1.bf16.msra.mxu0 0
      %1757 = vmatprep.subr.bf16.mxu0 0
      %1758 = vmatpush1.bf16.msra.mxu0 0
      %1759 = vmatprep.subr.bf16.mxu0 0
      %1760 = vmatpush1.bf16.msra.mxu0 0
      %1761 = vmatprep.subr.bf16.mxu0 0
      %1762 = vmatpush1.bf16.msra.mxu0 0
      %1763 = vmatprep.subr.bf16.mxu0 0
      %1764 = vmatpush1.bf16.msra.mxu0 0
      %1765 = vmatprep.subr.bf16.mxu0 0
      %1766 = vmatpush1.bf16.msra.mxu0 0
      %1767 = vmatprep.mubr.bf16.mxu0 0
      %1768 = vmatmul.mubr.bf16.gmra.mrb[0].mxu0 %v1663
      %v1769 = vpop.f32.mrb[0].mxu0
      %v1770 = vadd.f32 %v1685, %v1769
      %v1771 = vpop.f32.mrb[0].mxu0
      %v1772 = vpop.f32.mrb[0].mxu0
      %v1773 = vadd.f32 %v1685, %v1772
      %v1774 = vpop.f32.mrb[0].mxu0
      %1775 = vdwg.mxu0
      %v1776 = vadd.f32 %v1559, %v1770
      %v1777 = vadd.f32 %v1560, %v1773
      %v1778 = vld [vmem:[%s688] sm:$0x1]
      %v1779 = vld [vmem:[%s691] sm:$0x1]
      %v1780 = vsel %vm865, %v1776, 0.0
      %1781 = vadd.xlane.f32.xlu0 %v1780
      %v1782 = vpop.xlane.xlu0 %1781
      %v1783 = vsel %vm865, %v1777, 0.0
      %1784 = vadd.xlane.f32.xlu0 %v1783
      %v1785 = vpop.xlane.xlu0 %1784
      %v1786 = vmul.f32 %v1782, %v1524
      %v1787 = vmul.f32 %v1785, %v1524
      %v1788 = vsub.f32 %v1776, %v1786
      %v1789 = vsub.f32 %v1777, %v1787
      %v1790 = vmul.f32 %v1788, %v1788
      %v1791 = vmul.f32 %v1789, %v1789
      %v1792 = vsel %vm865, %v1790, 0.0
      %1793 = vadd.xlane.f32.xlu0 %v1792
      %v1794 = vpop.xlane.xlu0 %1793
      %v1795 = vsel %vm865, %v1791, 0.0
      %1796 = vadd.xlane.f32.xlu0 %v1795
      %v1797 = vpop.xlane.xlu0 %1796
      %v1798 = vmul.f32 %v1794, %v1524
      %v1799 = vmul.f32 %v1797, %v1524
      %v1800 = vadd.f32 %v1798, 1e-07
      %v1801 = vadd.f32 %v1799, 1e-07
      %v1802 = vrsqrt.pop %v1800
      %v1803 = vrsqrt.pop %v1801
      %v1804 = vmul.f32 %v1788, %v1802
      %v1805 = vmul.f32 %v1789, %v1803
      %v1807 = vlaneseq
      %v1808 = vshrl.u32 %v1807, 7
      %v1809 = vsub.s32 0, %v1808
      %v1810 = vrot.slane %v1778, %v1809
      %v1812 = vmul.f32 %v1804, %v1810
      %v1813 = vmul.f32 %v1805, %v1810
      %v1815 = vlaneseq
      %v1816 = vshrl.u32 %v1815, 7
      %v1817 = vsub.s32 0, %v1816
      %v1818 = vrot.slane %v1779, %v1817
      %v1820 = vadd.f32 %v1812, %v1818
      %v1821 = vadd.f32 %v1813, %v1818
      %1822 = vst.msk [vmem:[#allocation2] sm:$0xff] %vm865, %v1820
      %1823 = vst.msk [vmem:[#allocation2 + $0x8] sm:$0xff] %vm865, %v1821
      %p1824 = scmp.eq.s32.totalorder %s32, 1
      // Predicated region
      $region119: #{deberta_classifier_forward.1} parent=79 // pred_check
        %p1825 = pneg %p1824
      $region120: #{deberta_classifier_forward.1} parent=79 // pred_check_branch
        %1827 = sbr.rel (%p1825) target = $region122
      $region121: #{deberta_classifier_forward.1} parent=79 // pred_region
        %1828 = vst.msk [vmem:[%s696] sm:$0xff] %vm865, %v1820
        %1829 = vst.msk [vmem:[%s696 + $0x8] sm:$0xff] %vm865, %v1821
      $region122: #{deberta_classifier_forward.1} parent=79 // pred_fallthru
        _
      %s1830 = smul.u32 2, %s31
      %p1831 = scmp.lt.s32.totalorder %s1830, 3
      %s1832 = scalar_select %p1831, %s1830, 3
      %s1833 = smul.addr %s1832, 8
      %s1834 = scalar_lea.vmem %s16, %s1833
      // Predicated region
      $region123: #{deberta_classifier_forward.1} parent=79 // pred_check
        %p1835 = pneg %p437
      $region124: #{deberta_classifier_forward.1} parent=79 // pred_check_branch
        %1837 = sbr.rel (%p1835) target = $region126
      $region125: #{deberta_classifier_forward.1} parent=79 // pred_region
        %s1838 = smul.u32 2, %s31
      $region126: #{deberta_classifier_forward.1} parent=79 // pred_fallthru
        _
    $region80: #{deberta_classifier_forward.1} parent=5 // pred_fallthru
      _
    %p1839 = scmp.le.s32.totalorder 2, %s22
    // Predicated region
    $region127: #{deberta_classifier_forward.1} parent=5 // pred_check
      %p1840 = pneg %p1839
    $region128: #{deberta_classifier_forward.1} parent=5 // pred_check_branch
      %1842 = sbr.rel (%p1840) target = $region130
    $region129: #{deberta_classifier_forward.1} parent=5 // pred_region
      %s1843 = ssub.s32 %s22, 2
      // Predicated region
      $region131: #{deberta_classifier_forward.1} parent=129 // pred_check
        %p1844 = pneg %p443
      $region132: #{deberta_classifier_forward.1} parent=129 // pred_check_branch
        %1846 = sbr.rel (%p1844) target = $region134
      $region133: #{deberta_classifier_forward.1} parent=129 // pred_region
        %s1847 = smul.u32 2, %s33
        %p1848 = scmp.lt.s32.totalorder %s1847, 3
        %s1849 = scalar_select %p1848, %s1847, 3
        %s1850 = smul.addr %s1849, 8
        %s1851 = scalar_lea.vmem %s16, %s1850
      $region134: #{deberta_classifier_forward.1} parent=129 // pred_fallthru
        _
    $region130: #{deberta_classifier_forward.1} parent=5 // pred_fallthru
      _
  $region6: #{deberta_classifier_forward.1} parent=0 // loop_footer
    %s26 = sadd.s32 1, %s22
  $region7: #{deberta_classifier_forward.1} parent=0 // loop_footer_branch
    %21 = sbr.rel target = $region3
  $region8: #{deberta_classifier_forward.1} parent=0 // loop_exit
    _
  %1852 = vsyncmov [#allocation4]
  %s1853 = vpop.sfrf %1852
  %p1854 = scmp.eq.s32.totalorder %s1853, 0
  %p1855 = pneg %p1854
  %1857 = shalt.err (%p1855)

</llo_original>
